<compile_context>
chip_gen: v5e
topology: v5e:2x2
jax: 0.10.0
libtpu: 0.0.40
codegen_flags: <defaults>
</compile_context>

<pallas_src>
import jax
import jax.numpy as jnp
from jax.experimental import pallas as pl
from jax.experimental.pallas import tpu as pltpu

EPS = 1e-5

# Below this channel count the 3x3 conv is routed through VPU broadcast-FMAs
# instead of per-tap MXU matmuls: with K = C < 32 the MXU runs at <2%
# utilization and only adds push/drain latency.  For C >= 64 the per-tap
# (C,C)@(C,M) MXU mapping is healthy (v7x MRB accumulates in place).
_MXU_MIN_CHANNELS = 32


def _make_resblock_kernel(H, W):
    """Builds the fused ResidualBlock kernel for a fixed spatial size (H, W)."""

    def kernel(x_ref, hidx_ref, widx_ref,
               w1_ref, b1_ref, g1_ref, be1_ref,
               w2_ref, b2_ref, g2_ref, be2_ref,
               o_ref):
        # x_ref        : (C, M) f32, M = N*H*W  (lane-dense flattened pixels)
        # hidx/widx    : (1, M) i32 per-pixel spatial coordinates (host-built)
        # w*_ref       : (C, 9*C) conv weights, layout [out_ch, tap*C + in_ch]
        # b*/g*/be*    : (C, 1) conv bias / BN gamma / BN beta
        # o_ref        : (C, M) output
        C, M = x_ref.shape
        inv_m = 1.0 / float(M)

        h_idx = hidx_ref[...]        # (1, M)
        w_idx = widx_ref[...]        # (1, M)

        # Static metadata for the 9 taps: flat pixel shift d = dh*W + dw and a
        # (1, M) f32 boundary mask shared by both convs.  The mask zeroes every
        # element the roll wrapped across a row/image boundary, so the mask IS
        # the zero padding — no halo tensor is ever materialized.
        taps = []
        for kh in range(3):
            for kw in range(3):
                dh, dw = kh - 1, kw - 1
                d = dh * W + dw
                conds = []
                if dh < 0:
                    conds.append(h_idx >= -dh)
                elif dh > 0:
                    conds.append(h_idx < H - dh)
                if dw < 0:
                    conds.append(w_idx >= -dw)
                elif dw > 0:
                    conds.append(w_idx < W - dw)
                mask = None
                for c in conds:
                    mask = c if mask is None else (mask & c)
                mask_f = None if mask is None else mask.astype(jnp.float32)
                taps.append((d, mask_f))

        def conv3x3(y, w_ref, b_ref):
            # Per-tap accumulation, no im2col scratch:
            #   piece_t[c, m] = mask_t(m) * y[c, m + d_t]   (roll along lanes)
            #   acc += W_t @ piece_t
            # W_t @ piece_t is an MXU matmul for C >= 32, otherwise C broadcast
            # VPU FMAs (exact f32, keeps parity with the f32 PyTorch forward).
            w = w_ref[...]                                     # (C, 9C)
            acc = None
            for t, (d, mask_f) in enumerate(taps):
                piece = y if d == 0 else pltpu.roll(y, shift=(-d) % M, axis=1)
                if mask_f is not None:
                    piece = piece * mask_f                     # (1,M) broadcast
                if C >= _MXU_MIN_CHANNELS:
                    term = jnp.dot(w[:, t * C:(t + 1) * C], piece,
                                   preferred_element_type=jnp.float32)
                    acc = term if acc is None else acc + term
                else:
                    for i in range(C):
                        term = (w[:, t * C + i:t * C + i + 1]   # (C,1)
                                * piece[i:i + 1, :])            # (1,M) -> (C,M)
                        acc = term if acc is None else acc + term
            return acc + b_ref[...]

        def batchnorm(acc, g_ref, be_ref):
            # Two-pass (mean, then centered variance): matches PyTorch
            # training-mode BatchNorm2d (biased variance over N,H,W) and avoids
            # the E[x^2] - E[x]^2 cancellation of a single-pass formulation.
            mean = jnp.sum(acc, axis=1, keepdims=True) * inv_m
            cen = acc - mean
            var = jnp.sum(cen * cen, axis=1, keepdims=True) * inv_m
            return cen * jax.lax.rsqrt(var + EPS) * g_ref[...] + be_ref[...]

        out1 = jnp.maximum(
            batchnorm(conv3x3(x_ref[...], w1_ref, b1_ref), g1_ref, be1_ref), 0.0)
        out2 = batchnorm(conv3x3(out1, w2_ref, b2_ref), g2_ref, be2_ref)

        # Residual: re-read x_ref (still resident in VMEM) rather than keeping a
        # full-tensor value live across both convs.  Lane-dense unmasked store.
        o_ref[...] = jnp.maximum(out2 + x_ref[...], 0.0)

    return kernel


def residual_block(x_nchw, params):
    """x_nchw: (N, C, H, W) float32; params: tuple of weights. Returns NCHW."""
    w1, b1, g1, be1, w2, b2, g2, be2 = params
    N, C, H, W = x_nchw.shape
    # The module's residual add requires in_channels == out_channels, stride 1.
    assert w1.shape == (3, 3, C, C) and w2.shape == (3, 3, C, C)
    M = N * H * W

    # TODO(synk): in a full network keep activations in this (C, N*H*W) layout
    # across blocks (or fold the transpose into producer/consumer) instead of
    # paying an HBM round trip per block for the NCHW <-> (C, M) transposes.
    x_cm = jnp.transpose(x_nchw, (1, 0, 2, 3)).reshape(C, M).astype(jnp.float32)

    # Per-pixel spatial coordinates of the flat axis, built host-side so the
    # kernel never does vector int div/mod (works for non-power-of-two H/W).
    flat = jnp.arange(M, dtype=jnp.int32)
    w_idx = (flat % W).reshape(1, M)
    h_idx = ((flat // W) % H).reshape(1, M)

    def to_mat(w):   # HWIO (3,3,Cin,Cout) -> (Cout, 9*Cin), tap-major / in-ch minor
        return jnp.transpose(w, (3, 0, 1, 2)).reshape(C, 9 * C).astype(jnp.float32)

    def col(v):
        return v.reshape(C, 1).astype(jnp.float32)

    # Working set is a handful of (C, M) f32 planes (no im2col scratch anymore);
    # size scoped VMEM to it (defaults: 16 MiB v5e / 32 MiB v6e), cap at 64 MiB.
    plane = C * M * 4
    vmem_bytes = int(min(64 * 1024 * 1024, max(8 * 1024 * 1024, 10 * plane)))

    vmem_spec = pl.BlockSpec(memory_space=pltpu.MemorySpace.VMEM)

    # TODO(synk): for production-size N*H*W this single-program kernel should
    # become a gridded multi-pass BN pipeline (tile M with a "parallel" axis for
    # v7x's 2 TensorCores, accumulate per-channel sum/sumsq partials, then
    # normalize) so blocks double-buffer and the working set fits 64 MiB VMEM.
    out_cm = pl.pallas_call(
        _make_resblock_kernel(H, W),
        out_shape=jax.ShapeDtypeStruct((C, M), jnp.float32),
        in_specs=[vmem_spec] * 11,
        out_specs=vmem_spec,
        compiler_params=pltpu.CompilerParams(vmem_limit_bytes=vmem_bytes),
    )(x_cm, h_idx, w_idx,
      to_mat(w1), col(b1), col(g1), col(be1),
      to_mat(w2), col(b2), col(g2), col(be2))

    return jnp.transpose(out_cm.reshape(C, N, H, W), (1, 0, 2, 3))


def _ref_forward(x_nchw, params):
    """Pure-JAX reference (XLA conv at HIGHEST precision) for correctness."""
    w1, b1, g1, be1, w2, b2, g2, be2 = params
    x = jnp.transpose(x_nchw, (0, 2, 3, 1))

    def conv(y, w, b):
        z = jax.lax.conv_general_dilated(
            y, w, window_strides=(1, 1), padding='SAME',
            dimension_numbers=('NHWC', 'HWIO', 'NHWC'),
            precision=jax.lax.Precision.HIGHEST)
        return z + b

    def bn(y, g, be):
        m = jnp.mean(y, axis=(0, 1, 2), keepdims=True)
        v = jnp.mean((y - m) ** 2, axis=(0, 1, 2), keepdims=True)
        return (y - m) * jax.lax.rsqrt(v + EPS) * g + be

    out = jax.nn.relu(bn(conv(x, w1, b1), g1, be1))
    out = bn(conv(out, w2, b2), g2, be2)
    out = jax.nn.relu(out + x)
    return jnp.transpose(out, (0, 3, 1, 2))


if __name__ == "__main__":
    N, C, H, W = 2, 4, 16, 16   # in_channels == out_channels (residual add)

    key = jax.random.PRNGKey(0)
    k_x, k_w1, k_b1, k_w2, k_b2 = jax.random.split(key, 5)

    x = jax.random.normal(k_x, (N, C, H, W), jnp.float32)

    # Deterministic synthetic parameters (shapes per nn.Conv2d / nn.BatchNorm2d)
    w1 = jax.random.normal(k_w1, (3, 3, C, C), jnp.float32) * 0.1   # HWIO
    b1 = jax.random.normal(k_b1, (C,), jnp.float32) * 0.05
    g1 = jnp.ones((C,), jnp.float32)
    be1 = jnp.zeros((C,), jnp.float32)
    w2 = jax.random.normal(k_w2, (3, 3, C, C), jnp.float32) * 0.1
    b2 = jax.random.normal(k_b2, (C,), jnp.float32) * 0.05
    g2 = jnp.ones((C,), jnp.float32)
    be2 = jnp.zeros((C,), jnp.float32)

    params = (w1, b1, g1, be1, w2, b2, g2, be2)

    out = jax.block_until_ready(residual_block(x, params))
    ref = jax.block_until_ready(_ref_forward(x, params))

    assert out.shape == (N, C, H, W), out.shape
    assert jnp.allclose(out, ref, atol=1e-4, rtol=1e-4), \
        float(jnp.max(jnp.abs(out - ref)))

    print("KERNEL_OK")
</pallas_src>

<mosaic_0001>
module attributes {stable_mosaic.version = 11 : i64} {
  func.func @kernel(%arg0: memref<4x512xf32, #tpu.memory_space<vmem>>, %arg1: memref<1x512xi32, #tpu.memory_space<vmem>>, %arg2: memref<1x512xi32, #tpu.memory_space<vmem>>, %arg3: memref<4x36xf32, #tpu.memory_space<vmem>>, %arg4: memref<4x1xf32, #tpu.memory_space<vmem>>, %arg5: memref<4x1xf32, #tpu.memory_space<vmem>>, %arg6: memref<4x1xf32, #tpu.memory_space<vmem>>, %arg7: memref<4x36xf32, #tpu.memory_space<vmem>>, %arg8: memref<4x1xf32, #tpu.memory_space<vmem>>, %arg9: memref<4x1xf32, #tpu.memory_space<vmem>>, %arg10: memref<4x1xf32, #tpu.memory_space<vmem>>, %arg11: memref<4x512xf32, #tpu.memory_space<vmem>>) attributes {dimension_semantics = [], scalar_prefetch = 0 : i64, scratch_operands = 0 : i64, tpu.core_type = #tpu.core_type<tc>} {
    %c0 = arith.constant 0 : index
    %c0_0 = arith.constant 0 : index
    %0 = vector.load %arg1[%c0, %c0_0] : memref<1x512xi32, #tpu.memory_space<vmem>>, vector<1x512xi32>
    %c0_1 = arith.constant 0 : index
    %c0_2 = arith.constant 0 : index
    %1 = vector.load %arg2[%c0_1, %c0_2] : memref<1x512xi32, #tpu.memory_space<vmem>>, vector<1x512xi32>
    %c1_i32 = arith.constant 1 : i32
    %2 = vector.broadcast %c1_i32 : i32 to vector<1x512xi32>
    %3 = arith.cmpi sge, %0, %2 : vector<1x512xi32>
    %c1_i32_3 = arith.constant 1 : i32
    %4 = vector.broadcast %c1_i32_3 : i32 to vector<1x512xi32>
    %5 = arith.cmpi sge, %1, %4 : vector<1x512xi32>
    %6 = arith.andi %3, %5 : vector<1x512xi1>
    %7 = arith.extui %6 : vector<1x512xi1> to vector<1x512xi32>
    %8 = arith.sitofp %7 : vector<1x512xi32> to vector<1x512xf32>
    %c1_i32_4 = arith.constant 1 : i32
    %9 = vector.broadcast %c1_i32_4 : i32 to vector<1x512xi32>
    %10 = arith.cmpi sge, %0, %9 : vector<1x512xi32>
    %11 = arith.extui %10 : vector<1x512xi1> to vector<1x512xi32>
    %12 = arith.sitofp %11 : vector<1x512xi32> to vector<1x512xf32>
    %c1_i32_5 = arith.constant 1 : i32
    %13 = vector.broadcast %c1_i32_5 : i32 to vector<1x512xi32>
    %14 = arith.cmpi sge, %0, %13 : vector<1x512xi32>
    %c15_i32 = arith.constant 15 : i32
    %15 = vector.broadcast %c15_i32 : i32 to vector<1x512xi32>
    %16 = arith.cmpi slt, %1, %15 : vector<1x512xi32>
    %17 = arith.andi %14, %16 : vector<1x512xi1>
    %18 = arith.extui %17 : vector<1x512xi1> to vector<1x512xi32>
    %19 = arith.sitofp %18 : vector<1x512xi32> to vector<1x512xf32>
    %c1_i32_6 = arith.constant 1 : i32
    %20 = vector.broadcast %c1_i32_6 : i32 to vector<1x512xi32>
    %21 = arith.cmpi sge, %1, %20 : vector<1x512xi32>
    %22 = arith.extui %21 : vector<1x512xi1> to vector<1x512xi32>
    %23 = arith.sitofp %22 : vector<1x512xi32> to vector<1x512xf32>
    %c15_i32_7 = arith.constant 15 : i32
    %24 = vector.broadcast %c15_i32_7 : i32 to vector<1x512xi32>
    %25 = arith.cmpi slt, %1, %24 : vector<1x512xi32>
    %26 = arith.extui %25 : vector<1x512xi1> to vector<1x512xi32>
    %27 = arith.sitofp %26 : vector<1x512xi32> to vector<1x512xf32>
    %c15_i32_8 = arith.constant 15 : i32
    %28 = vector.broadcast %c15_i32_8 : i32 to vector<1x512xi32>
    %29 = arith.cmpi slt, %0, %28 : vector<1x512xi32>
    %c1_i32_9 = arith.constant 1 : i32
    %30 = vector.broadcast %c1_i32_9 : i32 to vector<1x512xi32>
    %31 = arith.cmpi sge, %1, %30 : vector<1x512xi32>
    %32 = arith.andi %29, %31 : vector<1x512xi1>
    %33 = arith.extui %32 : vector<1x512xi1> to vector<1x512xi32>
    %34 = arith.sitofp %33 : vector<1x512xi32> to vector<1x512xf32>
    %c15_i32_10 = arith.constant 15 : i32
    %35 = vector.broadcast %c15_i32_10 : i32 to vector<1x512xi32>
    %36 = arith.cmpi slt, %0, %35 : vector<1x512xi32>
    %37 = arith.extui %36 : vector<1x512xi1> to vector<1x512xi32>
    %38 = arith.sitofp %37 : vector<1x512xi32> to vector<1x512xf32>
    %c15_i32_11 = arith.constant 15 : i32
    %39 = vector.broadcast %c15_i32_11 : i32 to vector<1x512xi32>
    %40 = arith.cmpi slt, %0, %39 : vector<1x512xi32>
    %c15_i32_12 = arith.constant 15 : i32
    %41 = vector.broadcast %c15_i32_12 : i32 to vector<1x512xi32>
    %42 = arith.cmpi slt, %1, %41 : vector<1x512xi32>
    %43 = arith.andi %40, %42 : vector<1x512xi1>
    %44 = arith.extui %43 : vector<1x512xi1> to vector<1x512xi32>
    %45 = arith.sitofp %44 : vector<1x512xi32> to vector<1x512xf32>
    %c0_13 = arith.constant 0 : index
    %c0_14 = arith.constant 0 : index
    %46 = vector.load %arg0[%c0_13, %c0_14] : memref<4x512xf32, #tpu.memory_space<vmem>>, vector<4x512xf32>
    %c0_15 = arith.constant 0 : index
    %c0_16 = arith.constant 0 : index
    %47 = vector.load %arg3[%c0_15, %c0_16] : memref<4x36xf32, #tpu.memory_space<vmem>>, vector<4x36xf32>
    %c17_i32 = arith.constant 17 : i32
    %48 = tpu.dynamic_rotate %46 by %c17_i32 dim 1 : vector<4x512xf32>, i32 -> vector<4x512xf32>
    %49 = vector.broadcast %8 : vector<1x512xf32> to vector<4x512xf32>
    %50 = arith.mulf %48, %49 : vector<4x512xf32>
    %51 = vector.extract_strided_slice %47 {offsets = [0, 0], sizes = [4, 1], strides = [1, 1]} : vector<4x36xf32> to vector<4x1xf32>
    %52 = vector.extract_strided_slice %50 {offsets = [0, 0], sizes = [1, 512], strides = [1, 1]} : vector<4x512xf32> to vector<1x512xf32>
    %53 = vector.broadcast %51 : vector<4x1xf32> to vector<4x512xf32>
    %54 = vector.broadcast %52 : vector<1x512xf32> to vector<4x512xf32>
    %55 = arith.mulf %53, %54 : vector<4x512xf32>
    %56 = vector.extract_strided_slice %47 {offsets = [0, 1], sizes = [4, 1], strides = [1, 1]} : vector<4x36xf32> to vector<4x1xf32>
    %57 = vector.extract_strided_slice %50 {offsets = [1, 0], sizes = [1, 512], strides = [1, 1]} : vector<4x512xf32> to vector<1x512xf32>
    %58 = vector.broadcast %56 : vector<4x1xf32> to vector<4x512xf32>
    %59 = vector.broadcast %57 : vector<1x512xf32> to vector<4x512xf32>
    %60 = arith.mulf %58, %59 : vector<4x512xf32>
    %61 = arith.addf %55, %60 : vector<4x512xf32>
    %62 = vector.extract_strided_slice %47 {offsets = [0, 2], sizes = [4, 1], strides = [1, 1]} : vector<4x36xf32> to vector<4x1xf32>
    %63 = vector.extract_strided_slice %50 {offsets = [2, 0], sizes = [1, 512], strides = [1, 1]} : vector<4x512xf32> to vector<1x512xf32>
    %64 = vector.broadcast %62 : vector<4x1xf32> to vector<4x512xf32>
    %65 = vector.broadcast %63 : vector<1x512xf32> to vector<4x512xf32>
    %66 = arith.mulf %64, %65 : vector<4x512xf32>
    %67 = arith.addf %61, %66 : vector<4x512xf32>
    %68 = vector.extract_strided_slice %47 {offsets = [0, 3], sizes = [4, 1], strides = [1, 1]} : vector<4x36xf32> to vector<4x1xf32>
    %69 = vector.extract_strided_slice %50 {offsets = [3, 0], sizes = [1, 512], strides = [1, 1]} : vector<4x512xf32> to vector<1x512xf32>
    %70 = vector.broadcast %68 : vector<4x1xf32> to vector<4x512xf32>
    %71 = vector.broadcast %69 : vector<1x512xf32> to vector<4x512xf32>
    %72 = arith.mulf %70, %71 : vector<4x512xf32>
    %73 = arith.addf %67, %72 : vector<4x512xf32>
    %c16_i32 = arith.constant 16 : i32
    %74 = tpu.dynamic_rotate %46 by %c16_i32 dim 1 : vector<4x512xf32>, i32 -> vector<4x512xf32>
    %75 = vector.broadcast %12 : vector<1x512xf32> to vector<4x512xf32>
    %76 = arith.mulf %74, %75 : vector<4x512xf32>
    %77 = vector.extract_strided_slice %47 {offsets = [0, 4], sizes = [4, 1], strides = [1, 1]} : vector<4x36xf32> to vector<4x1xf32>
    %78 = vector.extract_strided_slice %76 {offsets = [0, 0], sizes = [1, 512], strides = [1, 1]} : vector<4x512xf32> to vector<1x512xf32>
    %79 = vector.broadcast %77 : vector<4x1xf32> to vector<4x512xf32>
    %80 = vector.broadcast %78 : vector<1x512xf32> to vector<4x512xf32>
    %81 = arith.mulf %79, %80 : vector<4x512xf32>
    %82 = arith.addf %73, %81 : vector<4x512xf32>
    %83 = vector.extract_strided_slice %47 {offsets = [0, 5], sizes = [4, 1], strides = [1, 1]} : vector<4x36xf32> to vector<4x1xf32>
    %84 = vector.extract_strided_slice %76 {offsets = [1, 0], sizes = [1, 512], strides = [1, 1]} : vector<4x512xf32> to vector<1x512xf32>
    %85 = vector.broadcast %83 : vector<4x1xf32> to vector<4x512xf32>
    %86 = vector.broadcast %84 : vector<1x512xf32> to vector<4x512xf32>
    %87 = arith.mulf %85, %86 : vector<4x512xf32>
    %88 = arith.addf %82, %87 : vector<4x512xf32>
    %89 = vector.extract_strided_slice %47 {offsets = [0, 6], sizes = [4, 1], strides = [1, 1]} : vector<4x36xf32> to vector<4x1xf32>
    %90 = vector.extract_strided_slice %76 {offsets = [2, 0], sizes = [1, 512], strides = [1, 1]} : vector<4x512xf32> to vector<1x512xf32>
    %91 = vector.broadcast %89 : vector<4x1xf32> to vector<4x512xf32>
    %92 = vector.broadcast %90 : vector<1x512xf32> to vector<4x512xf32>
    %93 = arith.mulf %91, %92 : vector<4x512xf32>
    %94 = arith.addf %88, %93 : vector<4x512xf32>
    %95 = vector.extract_strided_slice %47 {offsets = [0, 7], sizes = [4, 1], strides = [1, 1]} : vector<4x36xf32> to vector<4x1xf32>
    %96 = vector.extract_strided_slice %76 {offsets = [3, 0], sizes = [1, 512], strides = [1, 1]} : vector<4x512xf32> to vector<1x512xf32>
    %97 = vector.broadcast %95 : vector<4x1xf32> to vector<4x512xf32>
    %98 = vector.broadcast %96 : vector<1x512xf32> to vector<4x512xf32>
    %99 = arith.mulf %97, %98 : vector<4x512xf32>
    %100 = arith.addf %94, %99 : vector<4x512xf32>
    %c15_i32_17 = arith.constant 15 : i32
    %101 = tpu.dynamic_rotate %46 by %c15_i32_17 dim 1 : vector<4x512xf32>, i32 -> vector<4x512xf32>
    %102 = vector.broadcast %19 : vector<1x512xf32> to vector<4x512xf32>
    %103 = arith.mulf %101, %102 : vector<4x512xf32>
    %104 = vector.extract_strided_slice %47 {offsets = [0, 8], sizes = [4, 1], strides = [1, 1]} : vector<4x36xf32> to vector<4x1xf32>
    %105 = vector.extract_strided_slice %103 {offsets = [0, 0], sizes = [1, 512], strides = [1, 1]} : vector<4x512xf32> to vector<1x512xf32>
    %106 = vector.broadcast %104 : vector<4x1xf32> to vector<4x512xf32>
    %107 = vector.broadcast %105 : vector<1x512xf32> to vector<4x512xf32>
    %108 = arith.mulf %106, %107 : vector<4x512xf32>
    %109 = arith.addf %100, %108 : vector<4x512xf32>
    %110 = vector.extract_strided_slice %47 {offsets = [0, 9], sizes = [4, 1], strides = [1, 1]} : vector<4x36xf32> to vector<4x1xf32>
    %111 = vector.extract_strided_slice %103 {offsets = [1, 0], sizes = [1, 512], strides = [1, 1]} : vector<4x512xf32> to vector<1x512xf32>
    %112 = vector.broadcast %110 : vector<4x1xf32> to vector<4x512xf32>
    %113 = vector.broadcast %111 : vector<1x512xf32> to vector<4x512xf32>
    %114 = arith.mulf %112, %113 : vector<4x512xf32>
    %115 = arith.addf %109, %114 : vector<4x512xf32>
    %116 = vector.extract_strided_slice %47 {offsets = [0, 10], sizes = [4, 1], strides = [1, 1]} : vector<4x36xf32> to vector<4x1xf32>
    %117 = vector.extract_strided_slice %103 {offsets = [2, 0], sizes = [1, 512], strides = [1, 1]} : vector<4x512xf32> to vector<1x512xf32>
    %118 = vector.broadcast %116 : vector<4x1xf32> to vector<4x512xf32>
    %119 = vector.broadcast %117 : vector<1x512xf32> to vector<4x512xf32>
    %120 = arith.mulf %118, %119 : vector<4x512xf32>
    %121 = arith.addf %115, %120 : vector<4x512xf32>
    %122 = vector.extract_strided_slice %47 {offsets = [0, 11], sizes = [4, 1], strides = [1, 1]} : vector<4x36xf32> to vector<4x1xf32>
    %123 = vector.extract_strided_slice %103 {offsets = [3, 0], sizes = [1, 512], strides = [1, 1]} : vector<4x512xf32> to vector<1x512xf32>
    %124 = vector.broadcast %122 : vector<4x1xf32> to vector<4x512xf32>
    %125 = vector.broadcast %123 : vector<1x512xf32> to vector<4x512xf32>
    %126 = arith.mulf %124, %125 : vector<4x512xf32>
    %127 = arith.addf %121, %126 : vector<4x512xf32>
    %c1_i32_18 = arith.constant 1 : i32
    %128 = tpu.dynamic_rotate %46 by %c1_i32_18 dim 1 : vector<4x512xf32>, i32 -> vector<4x512xf32>
    %129 = vector.broadcast %23 : vector<1x512xf32> to vector<4x512xf32>
    %130 = arith.mulf %128, %129 : vector<4x512xf32>
    %131 = vector.extract_strided_slice %47 {offsets = [0, 12], sizes = [4, 1], strides = [1, 1]} : vector<4x36xf32> to vector<4x1xf32>
    %132 = vector.extract_strided_slice %130 {offsets = [0, 0], sizes = [1, 512], strides = [1, 1]} : vector<4x512xf32> to vector<1x512xf32>
    %133 = vector.broadcast %131 : vector<4x1xf32> to vector<4x512xf32>
    %134 = vector.broadcast %132 : vector<1x512xf32> to vector<4x512xf32>
    %135 = arith.mulf %133, %134 : vector<4x512xf32>
    %136 = arith.addf %127, %135 : vector<4x512xf32>
    %137 = vector.extract_strided_slice %47 {offsets = [0, 13], sizes = [4, 1], strides = [1, 1]} : vector<4x36xf32> to vector<4x1xf32>
    %138 = vector.extract_strided_slice %130 {offsets = [1, 0], sizes = [1, 512], strides = [1, 1]} : vector<4x512xf32> to vector<1x512xf32>
    %139 = vector.broadcast %137 : vector<4x1xf32> to vector<4x512xf32>
    %140 = vector.broadcast %138 : vector<1x512xf32> to vector<4x512xf32>
    %141 = arith.mulf %139, %140 : vector<4x512xf32>
    %142 = arith.addf %136, %141 : vector<4x512xf32>
    %143 = vector.extract_strided_slice %47 {offsets = [0, 14], sizes = [4, 1], strides = [1, 1]} : vector<4x36xf32> to vector<4x1xf32>
    %144 = vector.extract_strided_slice %130 {offsets = [2, 0], sizes = [1, 512], strides = [1, 1]} : vector<4x512xf32> to vector<1x512xf32>
    %145 = vector.broadcast %143 : vector<4x1xf32> to vector<4x512xf32>
    %146 = vector.broadcast %144 : vector<1x512xf32> to vector<4x512xf32>
    %147 = arith.mulf %145, %146 : vector<4x512xf32>
    %148 = arith.addf %142, %147 : vector<4x512xf32>
    %149 = vector.extract_strided_slice %47 {offsets = [0, 15], sizes = [4, 1], strides = [1, 1]} : vector<4x36xf32> to vector<4x1xf32>
    %150 = vector.extract_strided_slice %130 {offsets = [3, 0], sizes = [1, 512], strides = [1, 1]} : vector<4x512xf32> to vector<1x512xf32>
    %151 = vector.broadcast %149 : vector<4x1xf32> to vector<4x512xf32>
    %152 = vector.broadcast %150 : vector<1x512xf32> to vector<4x512xf32>
    %153 = arith.mulf %151, %152 : vector<4x512xf32>
    %154 = arith.addf %148, %153 : vector<4x512xf32>
    %155 = vector.extract_strided_slice %47 {offsets = [0, 16], sizes = [4, 1], strides = [1, 1]} : vector<4x36xf32> to vector<4x1xf32>
    %156 = vector.extract_strided_slice %46 {offsets = [0, 0], sizes = [1, 512], strides = [1, 1]} : vector<4x512xf32> to vector<1x512xf32>
    %157 = vector.broadcast %155 : vector<4x1xf32> to vector<4x512xf32>
    %158 = vector.broadcast %156 : vector<1x512xf32> to vector<4x512xf32>
    %159 = arith.mulf %157, %158 : vector<4x512xf32>
    %160 = arith.addf %154, %159 : vector<4x512xf32>
    %161 = vector.extract_strided_slice %47 {offsets = [0, 17], sizes = [4, 1], strides = [1, 1]} : vector<4x36xf32> to vector<4x1xf32>
    %162 = vector.extract_strided_slice %46 {offsets = [1, 0], sizes = [1, 512], strides = [1, 1]} : vector<4x512xf32> to vector<1x512xf32>
    %163 = vector.broadcast %161 : vector<4x1xf32> to vector<4x512xf32>
    %164 = vector.broadcast %162 : vector<1x512xf32> to vector<4x512xf32>
    %165 = arith.mulf %163, %164 : vector<4x512xf32>
    %166 = arith.addf %160, %165 : vector<4x512xf32>
    %167 = vector.extract_strided_slice %47 {offsets = [0, 18], sizes = [4, 1], strides = [1, 1]} : vector<4x36xf32> to vector<4x1xf32>
    %168 = vector.extract_strided_slice %46 {offsets = [2, 0], sizes = [1, 512], strides = [1, 1]} : vector<4x512xf32> to vector<1x512xf32>
    %169 = vector.broadcast %167 : vector<4x1xf32> to vector<4x512xf32>
    %170 = vector.broadcast %168 : vector<1x512xf32> to vector<4x512xf32>
    %171 = arith.mulf %169, %170 : vector<4x512xf32>
    %172 = arith.addf %166, %171 : vector<4x512xf32>
    %173 = vector.extract_strided_slice %47 {offsets = [0, 19], sizes = [4, 1], strides = [1, 1]} : vector<4x36xf32> to vector<4x1xf32>
    %174 = vector.extract_strided_slice %46 {offsets = [3, 0], sizes = [1, 512], strides = [1, 1]} : vector<4x512xf32> to vector<1x512xf32>
    %175 = vector.broadcast %173 : vector<4x1xf32> to vector<4x512xf32>
    %176 = vector.broadcast %174 : vector<1x512xf32> to vector<4x512xf32>
    %177 = arith.mulf %175, %176 : vector<4x512xf32>
    %178 = arith.addf %172, %177 : vector<4x512xf32>
    %c511_i32 = arith.constant 511 : i32
    %179 = tpu.dynamic_rotate %46 by %c511_i32 dim 1 : vector<4x512xf32>, i32 -> vector<4x512xf32>
    %180 = vector.broadcast %27 : vector<1x512xf32> to vector<4x512xf32>
    %181 = arith.mulf %179, %180 : vector<4x512xf32>
    %182 = vector.extract_strided_slice %47 {offsets = [0, 20], sizes = [4, 1], strides = [1, 1]} : vector<4x36xf32> to vector<4x1xf32>
    %183 = vector.extract_strided_slice %181 {offsets = [0, 0], sizes = [1, 512], strides = [1, 1]} : vector<4x512xf32> to vector<1x512xf32>
    %184 = vector.broadcast %182 : vector<4x1xf32> to vector<4x512xf32>
    %185 = vector.broadcast %183 : vector<1x512xf32> to vector<4x512xf32>
    %186 = arith.mulf %184, %185 : vector<4x512xf32>
    %187 = arith.addf %178, %186 : vector<4x512xf32>
    %188 = vector.extract_strided_slice %47 {offsets = [0, 21], sizes = [4, 1], strides = [1, 1]} : vector<4x36xf32> to vector<4x1xf32>
    %189 = vector.extract_strided_slice %181 {offsets = [1, 0], sizes = [1, 512], strides = [1, 1]} : vector<4x512xf32> to vector<1x512xf32>
    %190 = vector.broadcast %188 : vector<4x1xf32> to vector<4x512xf32>
    %191 = vector.broadcast %189 : vector<1x512xf32> to vector<4x512xf32>
    %192 = arith.mulf %190, %191 : vector<4x512xf32>
    %193 = arith.addf %187, %192 : vector<4x512xf32>
    %194 = vector.extract_strided_slice %47 {offsets = [0, 22], sizes = [4, 1], strides = [1, 1]} : vector<4x36xf32> to vector<4x1xf32>
    %195 = vector.extract_strided_slice %181 {offsets = [2, 0], sizes = [1, 512], strides = [1, 1]} : vector<4x512xf32> to vector<1x512xf32>
    %196 = vector.broadcast %194 : vector<4x1xf32> to vector<4x512xf32>
    %197 = vector.broadcast %195 : vector<1x512xf32> to vector<4x512xf32>
    %198 = arith.mulf %196, %197 : vector<4x512xf32>
    %199 = arith.addf %193, %198 : vector<4x512xf32>
    %200 = vector.extract_strided_slice %47 {offsets = [0, 23], sizes = [4, 1], strides = [1, 1]} : vector<4x36xf32> to vector<4x1xf32>
    %201 = vector.extract_strided_slice %181 {offsets = [3, 0], sizes = [1, 512], strides = [1, 1]} : vector<4x512xf32> to vector<1x512xf32>
    %202 = vector.broadcast %200 : vector<4x1xf32> to vector<4x512xf32>
    %203 = vector.broadcast %201 : vector<1x512xf32> to vector<4x512xf32>
    %204 = arith.mulf %202, %203 : vector<4x512xf32>
    %205 = arith.addf %199, %204 : vector<4x512xf32>
    %c497_i32 = arith.constant 497 : i32
    %206 = tpu.dynamic_rotate %46 by %c497_i32 dim 1 : vector<4x512xf32>, i32 -> vector<4x512xf32>
    %207 = vector.broadcast %34 : vector<1x512xf32> to vector<4x512xf32>
    %208 = arith.mulf %206, %207 : vector<4x512xf32>
    %209 = vector.extract_strided_slice %47 {offsets = [0, 24], sizes = [4, 1], strides = [1, 1]} : vector<4x36xf32> to vector<4x1xf32>
    %210 = vector.extract_strided_slice %208 {offsets = [0, 0], sizes = [1, 512], strides = [1, 1]} : vector<4x512xf32> to vector<1x512xf32>
    %211 = vector.broadcast %209 : vector<4x1xf32> to vector<4x512xf32>
    %212 = vector.broadcast %210 : vector<1x512xf32> to vector<4x512xf32>
    %213 = arith.mulf %211, %212 : vector<4x512xf32>
    %214 = arith.addf %205, %213 : vector<4x512xf32>
    %215 = vector.extract_strided_slice %47 {offsets = [0, 25], sizes = [4, 1], strides = [1, 1]} : vector<4x36xf32> to vector<4x1xf32>
    %216 = vector.extract_strided_slice %208 {offsets = [1, 0], sizes = [1, 512], strides = [1, 1]} : vector<4x512xf32> to vector<1x512xf32>
    %217 = vector.broadcast %215 : vector<4x1xf32> to vector<4x512xf32>
    %218 = vector.broadcast %216 : vector<1x512xf32> to vector<4x512xf32>
    %219 = arith.mulf %217, %218 : vector<4x512xf32>
    %220 = arith.addf %214, %219 : vector<4x512xf32>
    %221 = vector.extract_strided_slice %47 {offsets = [0, 26], sizes = [4, 1], strides = [1, 1]} : vector<4x36xf32> to vector<4x1xf32>
    %222 = vector.extract_strided_slice %208 {offsets = [2, 0], sizes = [1, 512], strides = [1, 1]} : vector<4x512xf32> to vector<1x512xf32>
    %223 = vector.broadcast %221 : vector<4x1xf32> to vector<4x512xf32>
    %224 = vector.broadcast %222 : vector<1x512xf32> to vector<4x512xf32>
    %225 = arith.mulf %223, %224 : vector<4x512xf32>
    %226 = arith.addf %220, %225 : vector<4x512xf32>
    %227 = vector.extract_strided_slice %47 {offsets = [0, 27], sizes = [4, 1], strides = [1, 1]} : vector<4x36xf32> to vector<4x1xf32>
    %228 = vector.extract_strided_slice %208 {offsets = [3, 0], sizes = [1, 512], strides = [1, 1]} : vector<4x512xf32> to vector<1x512xf32>
    %229 = vector.broadcast %227 : vector<4x1xf32> to vector<4x512xf32>
    %230 = vector.broadcast %228 : vector<1x512xf32> to vector<4x512xf32>
    %231 = arith.mulf %229, %230 : vector<4x512xf32>
    %232 = arith.addf %226, %231 : vector<4x512xf32>
    %c496_i32 = arith.constant 496 : i32
    %233 = tpu.dynamic_rotate %46 by %c496_i32 dim 1 : vector<4x512xf32>, i32 -> vector<4x512xf32>
    %234 = vector.broadcast %38 : vector<1x512xf32> to vector<4x512xf32>
    %235 = arith.mulf %233, %234 : vector<4x512xf32>
    %236 = vector.extract_strided_slice %47 {offsets = [0, 28], sizes = [4, 1], strides = [1, 1]} : vector<4x36xf32> to vector<4x1xf32>
    %237 = vector.extract_strided_slice %235 {offsets = [0, 0], sizes = [1, 512], strides = [1, 1]} : vector<4x512xf32> to vector<1x512xf32>
    %238 = vector.broadcast %236 : vector<4x1xf32> to vector<4x512xf32>
    %239 = vector.broadcast %237 : vector<1x512xf32> to vector<4x512xf32>
    %240 = arith.mulf %238, %239 : vector<4x512xf32>
    %241 = arith.addf %232, %240 : vector<4x512xf32>
    %242 = vector.extract_strided_slice %47 {offsets = [0, 29], sizes = [4, 1], strides = [1, 1]} : vector<4x36xf32> to vector<4x1xf32>
    %243 = vector.extract_strided_slice %235 {offsets = [1, 0], sizes = [1, 512], strides = [1, 1]} : vector<4x512xf32> to vector<1x512xf32>
    %244 = vector.broadcast %242 : vector<4x1xf32> to vector<4x512xf32>
    %245 = vector.broadcast %243 : vector<1x512xf32> to vector<4x512xf32>
    %246 = arith.mulf %244, %245 : vector<4x512xf32>
    %247 = arith.addf %241, %246 : vector<4x512xf32>
    %248 = vector.extract_strided_slice %47 {offsets = [0, 30], sizes = [4, 1], strides = [1, 1]} : vector<4x36xf32> to vector<4x1xf32>
    %249 = vector.extract_strided_slice %235 {offsets = [2, 0], sizes = [1, 512], strides = [1, 1]} : vector<4x512xf32> to vector<1x512xf32>
    %250 = vector.broadcast %248 : vector<4x1xf32> to vector<4x512xf32>
    %251 = vector.broadcast %249 : vector<1x512xf32> to vector<4x512xf32>
    %252 = arith.mulf %250, %251 : vector<4x512xf32>
    %253 = arith.addf %247, %252 : vector<4x512xf32>
    %254 = vector.extract_strided_slice %47 {offsets = [0, 31], sizes = [4, 1], strides = [1, 1]} : vector<4x36xf32> to vector<4x1xf32>
    %255 = vector.extract_strided_slice %235 {offsets = [3, 0], sizes = [1, 512], strides = [1, 1]} : vector<4x512xf32> to vector<1x512xf32>
    %256 = vector.broadcast %254 : vector<4x1xf32> to vector<4x512xf32>
    %257 = vector.broadcast %255 : vector<1x512xf32> to vector<4x512xf32>
    %258 = arith.mulf %256, %257 : vector<4x512xf32>
    %259 = arith.addf %253, %258 : vector<4x512xf32>
    %c495_i32 = arith.constant 495 : i32
    %260 = tpu.dynamic_rotate %46 by %c495_i32 dim 1 : vector<4x512xf32>, i32 -> vector<4x512xf32>
    %261 = vector.broadcast %45 : vector<1x512xf32> to vector<4x512xf32>
    %262 = arith.mulf %260, %261 : vector<4x512xf32>
    %263 = vector.extract_strided_slice %47 {offsets = [0, 32], sizes = [4, 1], strides = [1, 1]} : vector<4x36xf32> to vector<4x1xf32>
    %264 = vector.extract_strided_slice %262 {offsets = [0, 0], sizes = [1, 512], strides = [1, 1]} : vector<4x512xf32> to vector<1x512xf32>
    %265 = vector.broadcast %263 : vector<4x1xf32> to vector<4x512xf32>
    %266 = vector.broadcast %264 : vector<1x512xf32> to vector<4x512xf32>
    %267 = arith.mulf %265, %266 : vector<4x512xf32>
    %268 = arith.addf %259, %267 : vector<4x512xf32>
    %269 = vector.extract_strided_slice %47 {offsets = [0, 33], sizes = [4, 1], strides = [1, 1]} : vector<4x36xf32> to vector<4x1xf32>
    %270 = vector.extract_strided_slice %262 {offsets = [1, 0], sizes = [1, 512], strides = [1, 1]} : vector<4x512xf32> to vector<1x512xf32>
    %271 = vector.broadcast %269 : vector<4x1xf32> to vector<4x512xf32>
    %272 = vector.broadcast %270 : vector<1x512xf32> to vector<4x512xf32>
    %273 = arith.mulf %271, %272 : vector<4x512xf32>
    %274 = arith.addf %268, %273 : vector<4x512xf32>
    %275 = vector.extract_strided_slice %47 {offsets = [0, 34], sizes = [4, 1], strides = [1, 1]} : vector<4x36xf32> to vector<4x1xf32>
    %276 = vector.extract_strided_slice %262 {offsets = [2, 0], sizes = [1, 512], strides = [1, 1]} : vector<4x512xf32> to vector<1x512xf32>
    %277 = vector.broadcast %275 : vector<4x1xf32> to vector<4x512xf32>
    %278 = vector.broadcast %276 : vector<1x512xf32> to vector<4x512xf32>
    %279 = arith.mulf %277, %278 : vector<4x512xf32>
    %280 = arith.addf %274, %279 : vector<4x512xf32>
    %281 = vector.extract_strided_slice %47 {offsets = [0, 35], sizes = [4, 1], strides = [1, 1]} : vector<4x36xf32> to vector<4x1xf32>
    %282 = vector.extract_strided_slice %262 {offsets = [3, 0], sizes = [1, 512], strides = [1, 1]} : vector<4x512xf32> to vector<1x512xf32>
    %283 = vector.broadcast %281 : vector<4x1xf32> to vector<4x512xf32>
    %284 = vector.broadcast %282 : vector<1x512xf32> to vector<4x512xf32>
    %285 = arith.mulf %283, %284 : vector<4x512xf32>
    %286 = arith.addf %280, %285 : vector<4x512xf32>
    %c0_19 = arith.constant 0 : index
    %c0_20 = arith.constant 0 : index
    %287 = vector.load %arg4[%c0_19, %c0_20] : memref<4x1xf32, #tpu.memory_space<vmem>>, vector<4x1xf32>
    %288 = vector.broadcast %287 : vector<4x1xf32> to vector<4x512xf32>
    %289 = arith.addf %286, %288 : vector<4x512xf32>
    %cst = arith.constant dense<0.000000e+00> : vector<4xf32>
    %290 = vector.multi_reduction <add>, %289, %cst [1] : vector<4x512xf32> to vector<4xf32>
    %291 = vector.shape_cast %290 : vector<4xf32> to vector<4x1xf32>
    %cst_21 = arith.constant 0.001953125 : f32
    %292 = vector.broadcast %cst_21 : f32 to vector<4x1xf32>
    %293 = arith.mulf %291, %292 : vector<4x1xf32>
    %294 = vector.broadcast %293 : vector<4x1xf32> to vector<4x512xf32>
    %295 = arith.subf %289, %294 : vector<4x512xf32>
    %296 = arith.mulf %295, %295 : vector<4x512xf32>
    %cst_22 = arith.constant dense<0.000000e+00> : vector<4xf32>
    %297 = vector.multi_reduction <add>, %296, %cst_22 [1] : vector<4x512xf32> to vector<4xf32>
    %298 = vector.shape_cast %297 : vector<4xf32> to vector<4x1xf32>
    %cst_23 = arith.constant 0.001953125 : f32
    %299 = vector.broadcast %cst_23 : f32 to vector<4x1xf32>
    %300 = arith.mulf %298, %299 : vector<4x1xf32>
    %cst_24 = arith.constant 9.99999974E-6 : f32
    %301 = vector.broadcast %cst_24 : f32 to vector<4x1xf32>
    %302 = arith.addf %300, %301 : vector<4x1xf32>
    %303 = math.rsqrt %302 : vector<4x1xf32>
    %304 = vector.broadcast %303 : vector<4x1xf32> to vector<4x512xf32>
    %305 = arith.mulf %295, %304 : vector<4x512xf32>
    %c0_25 = arith.constant 0 : index
    %c0_26 = arith.constant 0 : index
    %306 = vector.load %arg5[%c0_25, %c0_26] : memref<4x1xf32, #tpu.memory_space<vmem>>, vector<4x1xf32>
    %307 = vector.broadcast %306 : vector<4x1xf32> to vector<4x512xf32>
    %308 = arith.mulf %305, %307 : vector<4x512xf32>
    %c0_27 = arith.constant 0 : index
    %c0_28 = arith.constant 0 : index
    %309 = vector.load %arg6[%c0_27, %c0_28] : memref<4x1xf32, #tpu.memory_space<vmem>>, vector<4x1xf32>
    %310 = vector.broadcast %309 : vector<4x1xf32> to vector<4x512xf32>
    %311 = arith.addf %308, %310 : vector<4x512xf32>
    %cst_29 = arith.constant 0.000000e+00 : f32
    %312 = vector.broadcast %cst_29 : f32 to vector<4x512xf32>
    %313 = arith.maximumf %311, %312 : vector<4x512xf32>
    %c0_30 = arith.constant 0 : index
    %c0_31 = arith.constant 0 : index
    %314 = vector.load %arg7[%c0_30, %c0_31] : memref<4x36xf32, #tpu.memory_space<vmem>>, vector<4x36xf32>
    %c17_i32_32 = arith.constant 17 : i32
    %315 = tpu.dynamic_rotate %313 by %c17_i32_32 dim 1 : vector<4x512xf32>, i32 -> vector<4x512xf32>
    %316 = vector.broadcast %8 : vector<1x512xf32> to vector<4x512xf32>
    %317 = arith.mulf %315, %316 : vector<4x512xf32>
    %318 = vector.extract_strided_slice %314 {offsets = [0, 0], sizes = [4, 1], strides = [1, 1]} : vector<4x36xf32> to vector<4x1xf32>
    %319 = vector.extract_strided_slice %317 {offsets = [0, 0], sizes = [1, 512], strides = [1, 1]} : vector<4x512xf32> to vector<1x512xf32>
    %320 = vector.broadcast %318 : vector<4x1xf32> to vector<4x512xf32>
    %321 = vector.broadcast %319 : vector<1x512xf32> to vector<4x512xf32>
    %322 = arith.mulf %320, %321 : vector<4x512xf32>
    %323 = vector.extract_strided_slice %314 {offsets = [0, 1], sizes = [4, 1], strides = [1, 1]} : vector<4x36xf32> to vector<4x1xf32>
    %324 = vector.extract_strided_slice %317 {offsets = [1, 0], sizes = [1, 512], strides = [1, 1]} : vector<4x512xf32> to vector<1x512xf32>
    %325 = vector.broadcast %323 : vector<4x1xf32> to vector<4x512xf32>
    %326 = vector.broadcast %324 : vector<1x512xf32> to vector<4x512xf32>
    %327 = arith.mulf %325, %326 : vector<4x512xf32>
    %328 = arith.addf %322, %327 : vector<4x512xf32>
    %329 = vector.extract_strided_slice %314 {offsets = [0, 2], sizes = [4, 1], strides = [1, 1]} : vector<4x36xf32> to vector<4x1xf32>
    %330 = vector.extract_strided_slice %317 {offsets = [2, 0], sizes = [1, 512], strides = [1, 1]} : vector<4x512xf32> to vector<1x512xf32>
    %331 = vector.broadcast %329 : vector<4x1xf32> to vector<4x512xf32>
    %332 = vector.broadcast %330 : vector<1x512xf32> to vector<4x512xf32>
    %333 = arith.mulf %331, %332 : vector<4x512xf32>
    %334 = arith.addf %328, %333 : vector<4x512xf32>
    %335 = vector.extract_strided_slice %314 {offsets = [0, 3], sizes = [4, 1], strides = [1, 1]} : vector<4x36xf32> to vector<4x1xf32>
    %336 = vector.extract_strided_slice %317 {offsets = [3, 0], sizes = [1, 512], strides = [1, 1]} : vector<4x512xf32> to vector<1x512xf32>
    %337 = vector.broadcast %335 : vector<4x1xf32> to vector<4x512xf32>
    %338 = vector.broadcast %336 : vector<1x512xf32> to vector<4x512xf32>
    %339 = arith.mulf %337, %338 : vector<4x512xf32>
    %340 = arith.addf %334, %339 : vector<4x512xf32>
    %c16_i32_33 = arith.constant 16 : i32
    %341 = tpu.dynamic_rotate %313 by %c16_i32_33 dim 1 : vector<4x512xf32>, i32 -> vector<4x512xf32>
    %342 = vector.broadcast %12 : vector<1x512xf32> to vector<4x512xf32>
    %343 = arith.mulf %341, %342 : vector<4x512xf32>
    %344 = vector.extract_strided_slice %314 {offsets = [0, 4], sizes = [4, 1], strides = [1, 1]} : vector<4x36xf32> to vector<4x1xf32>
    %345 = vector.extract_strided_slice %343 {offsets = [0, 0], sizes = [1, 512], strides = [1, 1]} : vector<4x512xf32> to vector<1x512xf32>
    %346 = vector.broadcast %344 : vector<4x1xf32> to vector<4x512xf32>
    %347 = vector.broadcast %345 : vector<1x512xf32> to vector<4x512xf32>
    %348 = arith.mulf %346, %347 : vector<4x512xf32>
    %349 = arith.addf %340, %348 : vector<4x512xf32>
    %350 = vector.extract_strided_slice %314 {offsets = [0, 5], sizes = [4, 1], strides = [1, 1]} : vector<4x36xf32> to vector<4x1xf32>
    %351 = vector.extract_strided_slice %343 {offsets = [1, 0], sizes = [1, 512], strides = [1, 1]} : vector<4x512xf32> to vector<1x512xf32>
    %352 = vector.broadcast %350 : vector<4x1xf32> to vector<4x512xf32>
    %353 = vector.broadcast %351 : vector<1x512xf32> to vector<4x512xf32>
    %354 = arith.mulf %352, %353 : vector<4x512xf32>
    %355 = arith.addf %349, %354 : vector<4x512xf32>
    %356 = vector.extract_strided_slice %314 {offsets = [0, 6], sizes = [4, 1], strides = [1, 1]} : vector<4x36xf32> to vector<4x1xf32>
    %357 = vector.extract_strided_slice %343 {offsets = [2, 0], sizes = [1, 512], strides = [1, 1]} : vector<4x512xf32> to vector<1x512xf32>
    %358 = vector.broadcast %356 : vector<4x1xf32> to vector<4x512xf32>
    %359 = vector.broadcast %357 : vector<1x512xf32> to vector<4x512xf32>
    %360 = arith.mulf %358, %359 : vector<4x512xf32>
    %361 = arith.addf %355, %360 : vector<4x512xf32>
    %362 = vector.extract_strided_slice %314 {offsets = [0, 7], sizes = [4, 1], strides = [1, 1]} : vector<4x36xf32> to vector<4x1xf32>
    %363 = vector.extract_strided_slice %343 {offsets = [3, 0], sizes = [1, 512], strides = [1, 1]} : vector<4x512xf32> to vector<1x512xf32>
    %364 = vector.broadcast %362 : vector<4x1xf32> to vector<4x512xf32>
    %365 = vector.broadcast %363 : vector<1x512xf32> to vector<4x512xf32>
    %366 = arith.mulf %364, %365 : vector<4x512xf32>
    %367 = arith.addf %361, %366 : vector<4x512xf32>
    %c15_i32_34 = arith.constant 15 : i32
    %368 = tpu.dynamic_rotate %313 by %c15_i32_34 dim 1 : vector<4x512xf32>, i32 -> vector<4x512xf32>
    %369 = vector.broadcast %19 : vector<1x512xf32> to vector<4x512xf32>
    %370 = arith.mulf %368, %369 : vector<4x512xf32>
    %371 = vector.extract_strided_slice %314 {offsets = [0, 8], sizes = [4, 1], strides = [1, 1]} : vector<4x36xf32> to vector<4x1xf32>
    %372 = vector.extract_strided_slice %370 {offsets = [0, 0], sizes = [1, 512], strides = [1, 1]} : vector<4x512xf32> to vector<1x512xf32>
    %373 = vector.broadcast %371 : vector<4x1xf32> to vector<4x512xf32>
    %374 = vector.broadcast %372 : vector<1x512xf32> to vector<4x512xf32>
    %375 = arith.mulf %373, %374 : vector<4x512xf32>
    %376 = arith.addf %367, %375 : vector<4x512xf32>
    %377 = vector.extract_strided_slice %314 {offsets = [0, 9], sizes = [4, 1], strides = [1, 1]} : vector<4x36xf32> to vector<4x1xf32>
    %378 = vector.extract_strided_slice %370 {offsets = [1, 0], sizes = [1, 512], strides = [1, 1]} : vector<4x512xf32> to vector<1x512xf32>
    %379 = vector.broadcast %377 : vector<4x1xf32> to vector<4x512xf32>
    %380 = vector.broadcast %378 : vector<1x512xf32> to vector<4x512xf32>
    %381 = arith.mulf %379, %380 : vector<4x512xf32>
    %382 = arith.addf %376, %381 : vector<4x512xf32>
    %383 = vector.extract_strided_slice %314 {offsets = [0, 10], sizes = [4, 1], strides = [1, 1]} : vector<4x36xf32> to vector<4x1xf32>
    %384 = vector.extract_strided_slice %370 {offsets = [2, 0], sizes = [1, 512], strides = [1, 1]} : vector<4x512xf32> to vector<1x512xf32>
    %385 = vector.broadcast %383 : vector<4x1xf32> to vector<4x512xf32>
    %386 = vector.broadcast %384 : vector<1x512xf32> to vector<4x512xf32>
    %387 = arith.mulf %385, %386 : vector<4x512xf32>
    %388 = arith.addf %382, %387 : vector<4x512xf32>
    %389 = vector.extract_strided_slice %314 {offsets = [0, 11], sizes = [4, 1], strides = [1, 1]} : vector<4x36xf32> to vector<4x1xf32>
    %390 = vector.extract_strided_slice %370 {offsets = [3, 0], sizes = [1, 512], strides = [1, 1]} : vector<4x512xf32> to vector<1x512xf32>
    %391 = vector.broadcast %389 : vector<4x1xf32> to vector<4x512xf32>
    %392 = vector.broadcast %390 : vector<1x512xf32> to vector<4x512xf32>
    %393 = arith.mulf %391, %392 : vector<4x512xf32>
    %394 = arith.addf %388, %393 : vector<4x512xf32>
    %c1_i32_35 = arith.constant 1 : i32
    %395 = tpu.dynamic_rotate %313 by %c1_i32_35 dim 1 : vector<4x512xf32>, i32 -> vector<4x512xf32>
    %396 = vector.broadcast %23 : vector<1x512xf32> to vector<4x512xf32>
    %397 = arith.mulf %395, %396 : vector<4x512xf32>
    %398 = vector.extract_strided_slice %314 {offsets = [0, 12], sizes = [4, 1], strides = [1, 1]} : vector<4x36xf32> to vector<4x1xf32>
    %399 = vector.extract_strided_slice %397 {offsets = [0, 0], sizes = [1, 512], strides = [1, 1]} : vector<4x512xf32> to vector<1x512xf32>
    %400 = vector.broadcast %398 : vector<4x1xf32> to vector<4x512xf32>
    %401 = vector.broadcast %399 : vector<1x512xf32> to vector<4x512xf32>
    %402 = arith.mulf %400, %401 : vector<4x512xf32>
    %403 = arith.addf %394, %402 : vector<4x512xf32>
    %404 = vector.extract_strided_slice %314 {offsets = [0, 13], sizes = [4, 1], strides = [1, 1]} : vector<4x36xf32> to vector<4x1xf32>
    %405 = vector.extract_strided_slice %397 {offsets = [1, 0], sizes = [1, 512], strides = [1, 1]} : vector<4x512xf32> to vector<1x512xf32>
    %406 = vector.broadcast %404 : vector<4x1xf32> to vector<4x512xf32>
    %407 = vector.broadcast %405 : vector<1x512xf32> to vector<4x512xf32>
    %408 = arith.mulf %406, %407 : vector<4x512xf32>
    %409 = arith.addf %403, %408 : vector<4x512xf32>
    %410 = vector.extract_strided_slice %314 {offsets = [0, 14], sizes = [4, 1], strides = [1, 1]} : vector<4x36xf32> to vector<4x1xf32>
    %411 = vector.extract_strided_slice %397 {offsets = [2, 0], sizes = [1, 512], strides = [1, 1]} : vector<4x512xf32> to vector<1x512xf32>
    %412 = vector.broadcast %410 : vector<4x1xf32> to vector<4x512xf32>
    %413 = vector.broadcast %411 : vector<1x512xf32> to vector<4x512xf32>
    %414 = arith.mulf %412, %413 : vector<4x512xf32>
    %415 = arith.addf %409, %414 : vector<4x512xf32>
    %416 = vector.extract_strided_slice %314 {offsets = [0, 15], sizes = [4, 1], strides = [1, 1]} : vector<4x36xf32> to vector<4x1xf32>
    %417 = vector.extract_strided_slice %397 {offsets = [3, 0], sizes = [1, 512], strides = [1, 1]} : vector<4x512xf32> to vector<1x512xf32>
    %418 = vector.broadcast %416 : vector<4x1xf32> to vector<4x512xf32>
    %419 = vector.broadcast %417 : vector<1x512xf32> to vector<4x512xf32>
    %420 = arith.mulf %418, %419 : vector<4x512xf32>
    %421 = arith.addf %415, %420 : vector<4x512xf32>
    %422 = vector.extract_strided_slice %314 {offsets = [0, 16], sizes = [4, 1], strides = [1, 1]} : vector<4x36xf32> to vector<4x1xf32>
    %423 = vector.extract_strided_slice %313 {offsets = [0, 0], sizes = [1, 512], strides = [1, 1]} : vector<4x512xf32> to vector<1x512xf32>
    %424 = vector.broadcast %422 : vector<4x1xf32> to vector<4x512xf32>
    %425 = vector.broadcast %423 : vector<1x512xf32> to vector<4x512xf32>
    %426 = arith.mulf %424, %425 : vector<4x512xf32>
    %427 = arith.addf %421, %426 : vector<4x512xf32>
    %428 = vector.extract_strided_slice %314 {offsets = [0, 17], sizes = [4, 1], strides = [1, 1]} : vector<4x36xf32> to vector<4x1xf32>
    %429 = vector.extract_strided_slice %313 {offsets = [1, 0], sizes = [1, 512], strides = [1, 1]} : vector<4x512xf32> to vector<1x512xf32>
    %430 = vector.broadcast %428 : vector<4x1xf32> to vector<4x512xf32>
    %431 = vector.broadcast %429 : vector<1x512xf32> to vector<4x512xf32>
    %432 = arith.mulf %430, %431 : vector<4x512xf32>
    %433 = arith.addf %427, %432 : vector<4x512xf32>
    %434 = vector.extract_strided_slice %314 {offsets = [0, 18], sizes = [4, 1], strides = [1, 1]} : vector<4x36xf32> to vector<4x1xf32>
    %435 = vector.extract_strided_slice %313 {offsets = [2, 0], sizes = [1, 512], strides = [1, 1]} : vector<4x512xf32> to vector<1x512xf32>
    %436 = vector.broadcast %434 : vector<4x1xf32> to vector<4x512xf32>
    %437 = vector.broadcast %435 : vector<1x512xf32> to vector<4x512xf32>
    %438 = arith.mulf %436, %437 : vector<4x512xf32>
    %439 = arith.addf %433, %438 : vector<4x512xf32>
    %440 = vector.extract_strided_slice %314 {offsets = [0, 19], sizes = [4, 1], strides = [1, 1]} : vector<4x36xf32> to vector<4x1xf32>
    %441 = vector.extract_strided_slice %313 {offsets = [3, 0], sizes = [1, 512], strides = [1, 1]} : vector<4x512xf32> to vector<1x512xf32>
    %442 = vector.broadcast %440 : vector<4x1xf32> to vector<4x512xf32>
    %443 = vector.broadcast %441 : vector<1x512xf32> to vector<4x512xf32>
    %444 = arith.mulf %442, %443 : vector<4x512xf32>
    %445 = arith.addf %439, %444 : vector<4x512xf32>
    %c511_i32_36 = arith.constant 511 : i32
    %446 = tpu.dynamic_rotate %313 by %c511_i32_36 dim 1 : vector<4x512xf32>, i32 -> vector<4x512xf32>
    %447 = vector.broadcast %27 : vector<1x512xf32> to vector<4x512xf32>
    %448 = arith.mulf %446, %447 : vector<4x512xf32>
    %449 = vector.extract_strided_slice %314 {offsets = [0, 20], sizes = [4, 1], strides = [1, 1]} : vector<4x36xf32> to vector<4x1xf32>
    %450 = vector.extract_strided_slice %448 {offsets = [0, 0], sizes = [1, 512], strides = [1, 1]} : vector<4x512xf32> to vector<1x512xf32>
    %451 = vector.broadcast %449 : vector<4x1xf32> to vector<4x512xf32>
    %452 = vector.broadcast %450 : vector<1x512xf32> to vector<4x512xf32>
    %453 = arith.mulf %451, %452 : vector<4x512xf32>
    %454 = arith.addf %445, %453 : vector<4x512xf32>
    %455 = vector.extract_strided_slice %314 {offsets = [0, 21], sizes = [4, 1], strides = [1, 1]} : vector<4x36xf32> to vector<4x1xf32>
    %456 = vector.extract_strided_slice %448 {offsets = [1, 0], sizes = [1, 512], strides = [1, 1]} : vector<4x512xf32> to vector<1x512xf32>
    %457 = vector.broadcast %455 : vector<4x1xf32> to vector<4x512xf32>
    %458 = vector.broadcast %456 : vector<1x512xf32> to vector<4x512xf32>
    %459 = arith.mulf %457, %458 : vector<4x512xf32>
    %460 = arith.addf %454, %459 : vector<4x512xf32>
    %461 = vector.extract_strided_slice %314 {offsets = [0, 22], sizes = [4, 1], strides = [1, 1]} : vector<4x36xf32> to vector<4x1xf32>
    %462 = vector.extract_strided_slice %448 {offsets = [2, 0], sizes = [1, 512], strides = [1, 1]} : vector<4x512xf32> to vector<1x512xf32>
    %463 = vector.broadcast %461 : vector<4x1xf32> to vector<4x512xf32>
    %464 = vector.broadcast %462 : vector<1x512xf32> to vector<4x512xf32>
    %465 = arith.mulf %463, %464 : vector<4x512xf32>
    %466 = arith.addf %460, %465 : vector<4x512xf32>
    %467 = vector.extract_strided_slice %314 {offsets = [0, 23], sizes = [4, 1], strides = [1, 1]} : vector<4x36xf32> to vector<4x1xf32>
    %468 = vector.extract_strided_slice %448 {offsets = [3, 0], sizes = [1, 512], strides = [1, 1]} : vector<4x512xf32> to vector<1x512xf32>
    %469 = vector.broadcast %467 : vector<4x1xf32> to vector<4x512xf32>
    %470 = vector.broadcast %468 : vector<1x512xf32> to vector<4x512xf32>
    %471 = arith.mulf %469, %470 : vector<4x512xf32>
    %472 = arith.addf %466, %471 : vector<4x512xf32>
    %c497_i32_37 = arith.constant 497 : i32
    %473 = tpu.dynamic_rotate %313 by %c497_i32_37 dim 1 : vector<4x512xf32>, i32 -> vector<4x512xf32>
    %474 = vector.broadcast %34 : vector<1x512xf32> to vector<4x512xf32>
    %475 = arith.mulf %473, %474 : vector<4x512xf32>
    %476 = vector.extract_strided_slice %314 {offsets = [0, 24], sizes = [4, 1], strides = [1, 1]} : vector<4x36xf32> to vector<4x1xf32>
    %477 = vector.extract_strided_slice %475 {offsets = [0, 0], sizes = [1, 512], strides = [1, 1]} : vector<4x512xf32> to vector<1x512xf32>
    %478 = vector.broadcast %476 : vector<4x1xf32> to vector<4x512xf32>
    %479 = vector.broadcast %477 : vector<1x512xf32> to vector<4x512xf32>
    %480 = arith.mulf %478, %479 : vector<4x512xf32>
    %481 = arith.addf %472, %480 : vector<4x512xf32>
    %482 = vector.extract_strided_slice %314 {offsets = [0, 25], sizes = [4, 1], strides = [1, 1]} : vector<4x36xf32> to vector<4x1xf32>
    %483 = vector.extract_strided_slice %475 {offsets = [1, 0], sizes = [1, 512], strides = [1, 1]} : vector<4x512xf32> to vector<1x512xf32>
    %484 = vector.broadcast %482 : vector<4x1xf32> to vector<4x512xf32>
    %485 = vector.broadcast %483 : vector<1x512xf32> to vector<4x512xf32>
    %486 = arith.mulf %484, %485 : vector<4x512xf32>
    %487 = arith.addf %481, %486 : vector<4x512xf32>
    %488 = vector.extract_strided_slice %314 {offsets = [0, 26], sizes = [4, 1], strides = [1, 1]} : vector<4x36xf32> to vector<4x1xf32>
    %489 = vector.extract_strided_slice %475 {offsets = [2, 0], sizes = [1, 512], strides = [1, 1]} : vector<4x512xf32> to vector<1x512xf32>
    %490 = vector.broadcast %488 : vector<4x1xf32> to vector<4x512xf32>
    %491 = vector.broadcast %489 : vector<1x512xf32> to vector<4x512xf32>
    %492 = arith.mulf %490, %491 : vector<4x512xf32>
    %493 = arith.addf %487, %492 : vector<4x512xf32>
    %494 = vector.extract_strided_slice %314 {offsets = [0, 27], sizes = [4, 1], strides = [1, 1]} : vector<4x36xf32> to vector<4x1xf32>
    %495 = vector.extract_strided_slice %475 {offsets = [3, 0], sizes = [1, 512], strides = [1, 1]} : vector<4x512xf32> to vector<1x512xf32>
    %496 = vector.broadcast %494 : vector<4x1xf32> to vector<4x512xf32>
    %497 = vector.broadcast %495 : vector<1x512xf32> to vector<4x512xf32>
    %498 = arith.mulf %496, %497 : vector<4x512xf32>
    %499 = arith.addf %493, %498 : vector<4x512xf32>
    %c496_i32_38 = arith.constant 496 : i32
    %500 = tpu.dynamic_rotate %313 by %c496_i32_38 dim 1 : vector<4x512xf32>, i32 -> vector<4x512xf32>
    %501 = vector.broadcast %38 : vector<1x512xf32> to vector<4x512xf32>
    %502 = arith.mulf %500, %501 : vector<4x512xf32>
    %503 = vector.extract_strided_slice %314 {offsets = [0, 28], sizes = [4, 1], strides = [1, 1]} : vector<4x36xf32> to vector<4x1xf32>
    %504 = vector.extract_strided_slice %502 {offsets = [0, 0], sizes = [1, 512], strides = [1, 1]} : vector<4x512xf32> to vector<1x512xf32>
    %505 = vector.broadcast %503 : vector<4x1xf32> to vector<4x512xf32>
    %506 = vector.broadcast %504 : vector<1x512xf32> to vector<4x512xf32>
    %507 = arith.mulf %505, %506 : vector<4x512xf32>
    %508 = arith.addf %499, %507 : vector<4x512xf32>
    %509 = vector.extract_strided_slice %314 {offsets = [0, 29], sizes = [4, 1], strides = [1, 1]} : vector<4x36xf32> to vector<4x1xf32>
    %510 = vector.extract_strided_slice %502 {offsets = [1, 0], sizes = [1, 512], strides = [1, 1]} : vector<4x512xf32> to vector<1x512xf32>
    %511 = vector.broadcast %509 : vector<4x1xf32> to vector<4x512xf32>
    %512 = vector.broadcast %510 : vector<1x512xf32> to vector<4x512xf32>
    %513 = arith.mulf %511, %512 : vector<4x512xf32>
    %514 = arith.addf %508, %513 : vector<4x512xf32>
    %515 = vector.extract_strided_slice %314 {offsets = [0, 30], sizes = [4, 1], strides = [1, 1]} : vector<4x36xf32> to vector<4x1xf32>
    %516 = vector.extract_strided_slice %502 {offsets = [2, 0], sizes = [1, 512], strides = [1, 1]} : vector<4x512xf32> to vector<1x512xf32>
    %517 = vector.broadcast %515 : vector<4x1xf32> to vector<4x512xf32>
    %518 = vector.broadcast %516 : vector<1x512xf32> to vector<4x512xf32>
    %519 = arith.mulf %517, %518 : vector<4x512xf32>
    %520 = arith.addf %514, %519 : vector<4x512xf32>
    %521 = vector.extract_strided_slice %314 {offsets = [0, 31], sizes = [4, 1], strides = [1, 1]} : vector<4x36xf32> to vector<4x1xf32>
    %522 = vector.extract_strided_slice %502 {offsets = [3, 0], sizes = [1, 512], strides = [1, 1]} : vector<4x512xf32> to vector<1x512xf32>
    %523 = vector.broadcast %521 : vector<4x1xf32> to vector<4x512xf32>
    %524 = vector.broadcast %522 : vector<1x512xf32> to vector<4x512xf32>
    %525 = arith.mulf %523, %524 : vector<4x512xf32>
    %526 = arith.addf %520, %525 : vector<4x512xf32>
    %c495_i32_39 = arith.constant 495 : i32
    %527 = tpu.dynamic_rotate %313 by %c495_i32_39 dim 1 : vector<4x512xf32>, i32 -> vector<4x512xf32>
    %528 = vector.broadcast %45 : vector<1x512xf32> to vector<4x512xf32>
    %529 = arith.mulf %527, %528 : vector<4x512xf32>
    %530 = vector.extract_strided_slice %314 {offsets = [0, 32], sizes = [4, 1], strides = [1, 1]} : vector<4x36xf32> to vector<4x1xf32>
    %531 = vector.extract_strided_slice %529 {offsets = [0, 0], sizes = [1, 512], strides = [1, 1]} : vector<4x512xf32> to vector<1x512xf32>
    %532 = vector.broadcast %530 : vector<4x1xf32> to vector<4x512xf32>
    %533 = vector.broadcast %531 : vector<1x512xf32> to vector<4x512xf32>
    %534 = arith.mulf %532, %533 : vector<4x512xf32>
    %535 = arith.addf %526, %534 : vector<4x512xf32>
    %536 = vector.extract_strided_slice %314 {offsets = [0, 33], sizes = [4, 1], strides = [1, 1]} : vector<4x36xf32> to vector<4x1xf32>
    %537 = vector.extract_strided_slice %529 {offsets = [1, 0], sizes = [1, 512], strides = [1, 1]} : vector<4x512xf32> to vector<1x512xf32>
    %538 = vector.broadcast %536 : vector<4x1xf32> to vector<4x512xf32>
    %539 = vector.broadcast %537 : vector<1x512xf32> to vector<4x512xf32>
    %540 = arith.mulf %538, %539 : vector<4x512xf32>
    %541 = arith.addf %535, %540 : vector<4x512xf32>
    %542 = vector.extract_strided_slice %314 {offsets = [0, 34], sizes = [4, 1], strides = [1, 1]} : vector<4x36xf32> to vector<4x1xf32>
    %543 = vector.extract_strided_slice %529 {offsets = [2, 0], sizes = [1, 512], strides = [1, 1]} : vector<4x512xf32> to vector<1x512xf32>
    %544 = vector.broadcast %542 : vector<4x1xf32> to vector<4x512xf32>
    %545 = vector.broadcast %543 : vector<1x512xf32> to vector<4x512xf32>
    %546 = arith.mulf %544, %545 : vector<4x512xf32>
    %547 = arith.addf %541, %546 : vector<4x512xf32>
    %548 = vector.extract_strided_slice %314 {offsets = [0, 35], sizes = [4, 1], strides = [1, 1]} : vector<4x36xf32> to vector<4x1xf32>
    %549 = vector.extract_strided_slice %529 {offsets = [3, 0], sizes = [1, 512], strides = [1, 1]} : vector<4x512xf32> to vector<1x512xf32>
    %550 = vector.broadcast %548 : vector<4x1xf32> to vector<4x512xf32>
    %551 = vector.broadcast %549 : vector<1x512xf32> to vector<4x512xf32>
    %552 = arith.mulf %550, %551 : vector<4x512xf32>
    %553 = arith.addf %547, %552 : vector<4x512xf32>
    %c0_40 = arith.constant 0 : index
    %c0_41 = arith.constant 0 : index
    %554 = vector.load %arg8[%c0_40, %c0_41] : memref<4x1xf32, #tpu.memory_space<vmem>>, vector<4x1xf32>
    %555 = vector.broadcast %554 : vector<4x1xf32> to vector<4x512xf32>
    %556 = arith.addf %553, %555 : vector<4x512xf32>
    %cst_42 = arith.constant dense<0.000000e+00> : vector<4xf32>
    %557 = vector.multi_reduction <add>, %556, %cst_42 [1] : vector<4x512xf32> to vector<4xf32>
    %558 = vector.shape_cast %557 : vector<4xf32> to vector<4x1xf32>
    %cst_43 = arith.constant 0.001953125 : f32
    %559 = vector.broadcast %cst_43 : f32 to vector<4x1xf32>
    %560 = arith.mulf %558, %559 : vector<4x1xf32>
    %561 = vector.broadcast %560 : vector<4x1xf32> to vector<4x512xf32>
    %562 = arith.subf %556, %561 : vector<4x512xf32>
    %563 = arith.mulf %562, %562 : vector<4x512xf32>
    %cst_44 = arith.constant dense<0.000000e+00> : vector<4xf32>
    %564 = vector.multi_reduction <add>, %563, %cst_44 [1] : vector<4x512xf32> to vector<4xf32>
    %565 = vector.shape_cast %564 : vector<4xf32> to vector<4x1xf32>
    %cst_45 = arith.constant 0.001953125 : f32
    %566 = vector.broadcast %cst_45 : f32 to vector<4x1xf32>
    %567 = arith.mulf %565, %566 : vector<4x1xf32>
    %cst_46 = arith.constant 9.99999974E-6 : f32
    %568 = vector.broadcast %cst_46 : f32 to vector<4x1xf32>
    %569 = arith.addf %567, %568 : vector<4x1xf32>
    %570 = math.rsqrt %569 : vector<4x1xf32>
    %571 = vector.broadcast %570 : vector<4x1xf32> to vector<4x512xf32>
    %572 = arith.mulf %562, %571 : vector<4x512xf32>
    %c0_47 = arith.constant 0 : index
    %c0_48 = arith.constant 0 : index
    %573 = vector.load %arg9[%c0_47, %c0_48] : memref<4x1xf32, #tpu.memory_space<vmem>>, vector<4x1xf32>
    %574 = vector.broadcast %573 : vector<4x1xf32> to vector<4x512xf32>
    %575 = arith.mulf %572, %574 : vector<4x512xf32>
    %c0_49 = arith.constant 0 : index
    %c0_50 = arith.constant 0 : index
    %576 = vector.load %arg10[%c0_49, %c0_50] : memref<4x1xf32, #tpu.memory_space<vmem>>, vector<4x1xf32>
    %577 = vector.broadcast %576 : vector<4x1xf32> to vector<4x512xf32>
    %578 = arith.addf %575, %577 : vector<4x512xf32>
    %c0_51 = arith.constant 0 : index
    %c0_52 = arith.constant 0 : index
    %579 = vector.load %arg0[%c0_51, %c0_52] : memref<4x512xf32, #tpu.memory_space<vmem>>, vector<4x512xf32>
    %580 = arith.addf %578, %579 : vector<4x512xf32>
    %cst_53 = arith.constant 0.000000e+00 : f32
    %581 = vector.broadcast %cst_53 : f32 to vector<4x512xf32>
    %582 = arith.maximumf %580, %581 : vector<4x512xf32>
    %c0_54 = arith.constant 0 : index
    %c0_55 = arith.constant 0 : index
    %583 = vector.load %arg11[%c0_54, %c0_55] : memref<4x512xf32, #tpu.memory_space<vmem>>, vector<4x512xf32>
    tpu.vector_store %arg11[%c0_54, %c0_55], %582 {strides = array<i32>} : memref<4x512xf32, #tpu.memory_space<vmem>>, vector<4x512xf32>,
    return
  }
}

</mosaic_0001>

<llo_original>
// kernel: tpu_custom_call.1
$region0: #{tpu_custom_call.1}
  #allocation0 [shape = 'u32[]', space=smem, size = 0x4, offset = 0x4, fixed_abs, tag = 'smem constant byte address 0x4 - core index']
  #allocation1 [shape = 'u32[72,128]{1,0:T(1,128)}', space=vmem, size = 0x9000, scoped, tag = 'internal scratch']
  %s0 = inlined_call_operand.hbm [shape: f32[4,512], index: 0, kind: input, shape index: {}]
  %s1 = inlined_call_operand.vmem [shape: s32[1,512], index: 1, kind: input, shape index: {}]
  %s2 = inlined_call_operand.vmem [shape: s32[1,512], index: 2, kind: input, shape index: {}]
  %s3 = inlined_call_operand.vmem [shape: f32[4,36], index: 3, kind: input, shape index: {}]
  %s4 = inlined_call_operand.vmem [shape: f32[4,1], index: 4, kind: input, shape index: {}]
  %s5 = inlined_call_operand.vmem [shape: f32[4,1], index: 5, kind: input, shape index: {}]
  %s6 = inlined_call_operand.vmem [shape: f32[4,1], index: 6, kind: input, shape index: {}]
  %s7 = inlined_call_operand.vmem [shape: f32[4,36], index: 7, kind: input, shape index: {}]
  %s8 = inlined_call_operand.vmem [shape: f32[4,1], index: 8, kind: input, shape index: {}]
  %s9 = inlined_call_operand.vmem [shape: f32[4,1], index: 9, kind: input, shape index: {}]
  %s10 = inlined_call_operand.vmem [shape: f32[4,1], index: 10, kind: input, shape index: {}]
  %s11 = inlined_call_operand.hbm [shape: f32[4,512], index: 11, kind: output, shape index: {}]
  %s12 = sld [smem:[#allocation0]]
  $region58: #{tpu_custom_call.1} parent=0
    _
  %s14 = ssub.s32 1, %s12
  %s15 = scalar_select 0, %s14, %s12
  $region1: #{tpu_custom_call.1} parent=0
    #allocation2 [shape = 'u8[8192]{0}', space=vmem, size = 0x2000, scoped, tag = 'input window, operand 0, single buffered']
    #allocation3 [shape = 's32[1]{0}', space=sflag, size = 0x4, scoped, tag = 'scoped memory for tpu_custom_call.1']
    #allocation4 [shape = 's32[1]{0}', space=sflag, size = 0x4, scoped, tag = 'scoped memory for tpu_custom_call.1']
    #allocation5 [shape = 'u8[8192]{0}', space=vmem, size = 0x2000, scoped, tag = 'output window, operand 0, single buffered']
    %16 = vsyncpa [#allocation3], 0
    %17 = vsyncpa [#allocation4], 0
    // Predicated region
    $region2: #{tpu_custom_call.1} parent=1 // pred_check
      _
    $region3: #{tpu_custom_call.1} parent=1 // pred_check_branch
      %19 = sbr.rel (0) target = $region5
    $region4: #{tpu_custom_call.1} parent=1 // pred_region
      %21 = vsyncadd [#allocation3], 0
      %s23 = sshll.u32 %s0, 4
      %s24 = int_to_ptr.hbm [resolvable:$true] %s23
      %s25 = sshll.u32 [#allocation2], 4
      %s26 = int_to_ptr.vmem [resolvable:$true] %s25
      %28 = dma.hbm_to_vmem [thread:$0]  %s24, 256, %s26, [#allocation3]
    $region5: #{tpu_custom_call.1} parent=1 // pred_fallthru
      _
    // Predicated region
    $region6: #{tpu_custom_call.1} parent=1 // pred_check
      _
    $region7: #{tpu_custom_call.1} parent=1 // pred_check_branch
      %30 = sbr.rel (0) target = $region9
    $region8: #{tpu_custom_call.1} parent=1 // pred_region
      _
    $region9: #{tpu_custom_call.1} parent=1 // pred_fallthru
      _
    // Predicated region
    $region10: #{tpu_custom_call.1} parent=1 // pred_check
      _
    $region11: #{tpu_custom_call.1} parent=1 // pred_check_branch
      %32 = sbr.rel (0) target = $region13
    $region12: #{tpu_custom_call.1} parent=1 // pred_region
      _
    $region13: #{tpu_custom_call.1} parent=1 // pred_fallthru
      _
    // Predicated region
    $region14: #{tpu_custom_call.1} parent=1 // pred_check
      _
    $region15: #{tpu_custom_call.1} parent=1 // pred_check_branch
      %34 = sbr.rel (0) target = $region17
    $region16: #{tpu_custom_call.1} parent=1 // pred_region
      _
    $region17: #{tpu_custom_call.1} parent=1 // pred_fallthru
      _
    // Predicated region
    $region18: #{tpu_custom_call.1} parent=1 // pred_check
      _
    $region19: #{tpu_custom_call.1} parent=1 // pred_check_branch
      %36 = sbr.rel (0) target = $region21
    $region20: #{tpu_custom_call.1} parent=1 // pred_region
      _
    $region21: #{tpu_custom_call.1} parent=1 // pred_fallthru
      _
    // Predicated region
    $region22: #{tpu_custom_call.1} parent=1 // pred_check
      _
    $region23: #{tpu_custom_call.1} parent=1 // pred_check_branch
      %38 = sbr.rel (0) target = $region25
    $region24: #{tpu_custom_call.1} parent=1 // pred_region
      _
    $region25: #{tpu_custom_call.1} parent=1 // pred_fallthru
      _
    // Predicated region
    $region26: #{tpu_custom_call.1} parent=1 // pred_check
      _
    $region27: #{tpu_custom_call.1} parent=1 // pred_check_branch
      %40 = sbr.rel (0) target = $region29
    $region28: #{tpu_custom_call.1} parent=1 // pred_region
      _
    $region29: #{tpu_custom_call.1} parent=1 // pred_fallthru
      _
    // Predicated region
    $region30: #{tpu_custom_call.1} parent=1 // pred_check
      _
    $region31: #{tpu_custom_call.1} parent=1 // pred_check_branch
      %42 = sbr.rel (0) target = $region33
    $region32: #{tpu_custom_call.1} parent=1 // pred_region
      _
    $region33: #{tpu_custom_call.1} parent=1 // pred_fallthru
      _
    // Predicated region
    $region34: #{tpu_custom_call.1} parent=1 // pred_check
      _
    $region35: #{tpu_custom_call.1} parent=1 // pred_check_branch
      %44 = sbr.rel (0) target = $region37
    $region36: #{tpu_custom_call.1} parent=1 // pred_region
      _
    $region37: #{tpu_custom_call.1} parent=1 // pred_fallthru
      _
    // Predicated region
    $region38: #{tpu_custom_call.1} parent=1 // pred_check
      _
    $region39: #{tpu_custom_call.1} parent=1 // pred_check_branch
      %46 = sbr.rel (0) target = $region41
    $region40: #{tpu_custom_call.1} parent=1 // pred_region
      _
    $region41: #{tpu_custom_call.1} parent=1 // pred_fallthru
      _
    // Predicated region
    $region42: #{tpu_custom_call.1} parent=1 // pred_check
      _
    $region43: #{tpu_custom_call.1} parent=1 // pred_check_branch
      %48 = sbr.rel (0) target = $region45
    $region44: #{tpu_custom_call.1} parent=1 // pred_region
      _
    $region45: #{tpu_custom_call.1} parent=1 // pred_fallthru
      _
    // Predicated region
    $region46: #{tpu_custom_call.1} parent=1 // pred_check
      _
    $region47: #{tpu_custom_call.1} parent=1 // pred_check_branch
      %50 = sbr.rel (0) target = $region49
    $region48: #{tpu_custom_call.1} parent=1 // pred_region
      %52 = dma.done [#allocation3], 256
    $region49: #{tpu_custom_call.1} parent=1 // pred_fallthru
      _
    %v53 = vld [vmem:[%s1] sm:$0xf]
    %v54 = vld [vmem:[%s2] sm:$0xf]
    %vm55 = vcmp.ge.s32.totalorder %v53, 1
    %vm56 = vcmp.ge.s32.totalorder %v54, 1
    %vm57 = vmand %vm55, %vm56
    %v58 = vsel %vm57, 1, 0
    %v59 = vcvt.s32.f32 %v58
    %v60 = vsel %vm55, 1, 0
    %v61 = vcvt.s32.f32 %v60
    %vm62 = vcmp.lt.s32.totalorder %v54, 15
    %vm63 = vmand %vm55, %vm62
    %v64 = vsel %vm63, 1, 0
    %v65 = vcvt.s32.f32 %v64
    %v66 = vsel %vm56, 1, 0
    %v67 = vcvt.s32.f32 %v66
    %v68 = vsel %vm62, 1, 0
    %v69 = vcvt.s32.f32 %v68
    %vm70 = vcmp.lt.s32.totalorder %v53, 15
    %vm71 = vmand %vm70, %vm56
    %v72 = vsel %vm71, 1, 0
    %v73 = vcvt.s32.f32 %v72
    %v74 = vsel %vm70, 1, 0
    %v75 = vcvt.s32.f32 %v74
    %vm76 = vmand %vm70, %vm62
    %v77 = vsel %vm76, 1, 0
    %v78 = vcvt.s32.f32 %v77
    %v79 = vld [vmem:[#allocation2] sm:$0xff]
    %v80 = vld [vmem:[#allocation2 + $0x8] sm:$0xff]
    %v81 = vld [vmem:[%s3] sm:$0xf]
    %84 = vst [vmem:[#allocation1] ss:$2 sm:$0xff] %v79
    %s85 = scalar_lea.vmem [#allocation1], 16
    %86 = vst [vmem:[%s85] ss:$2 sm:$0xff] %v80
    %v87 = vld.sshfl [vmem:[#allocation1] sm:$0xff pattern:$0x75316420]
    %v88 = vld.sshfl [vmem:[#allocation1 + $0x8] sm:$0xff pattern:$0x75316420]
    %v89 = vld.sshfl [vmem:[#allocation1 + $0x10] sm:$0xff pattern:$0x75316420]
    %v90 = vld.sshfl [vmem:[#allocation1 + $0x18] sm:$0xff pattern:$0x75316420]
    %95 = vrot.lane.b32.xlu0 %v87, 17
    %v96 = vpop.permute.xlu0 %95
    %97 = vrot.lane.b32.xlu0 %v88, 17
    %v98 = vpop.permute.xlu0 %97
    %99 = vrot.lane.b32.xlu0 %v89, 17
    %v100 = vpop.permute.xlu0 %99
    %101 = vrot.lane.b32.xlu0 %v90, 17
    %v102 = vpop.permute.xlu0 %101
    %v103 = vlaneseq
    %v104 = vand.u32 %v103, 127
    %vm105 = vcmp.lt.s32.totalorder %v104, 17
    %v106 = vsel %vm105, %v100, %v102
    %v107 = vsel %vm105, %v98, %v100
    %v108 = vsel %vm105, %v96, %v98
    %v109 = vsel %vm105, %v102, %v96
    %v111 = vperm.slane %v59, 0
    %v112 = vperm.slane %v59, 1
    %v113 = vperm.slane %v59, 2
    %v114 = vperm.slane %v59, 3
    %v119 = vmul.f32 %v109, %v111
    %v120 = vmul.f32 %v108, %v112
    %v121 = vmul.f32 %v107, %v113
    %v122 = vmul.f32 %v106, %v114
    %124 = vset.pattern.permute.xlu0 0
    %125 = vperm.xlu0 %124, %v81
    %v126 = vpop.permute.xlu0 %125
    %v128 = vperm.slane %v119, 0
    %v129 = vperm.slane %v120, 0
    %v130 = vperm.slane %v121, 0
    %v131 = vperm.slane %v122, 0
    %v132 = vmul.f32 %v126, %v128
    %v133 = vmul.f32 %v126, %v129
    %v134 = vmul.f32 %v126, %v130
    %v135 = vmul.f32 %v126, %v131
    %136 = vset.pattern.permute.xlu0 1
    %137 = vperm.xlu0 %136, %v81
    %v138 = vpop.permute.xlu0 %137
    %v140 = vperm.slane %v119, 1
    %v141 = vperm.slane %v120, 1
    %v142 = vperm.slane %v121, 1
    %v143 = vperm.slane %v122, 1
    %v144 = vmul.f32 %v138, %v140
    %v145 = vmul.f32 %v138, %v141
    %v146 = vmul.f32 %v138, %v142
    %v147 = vmul.f32 %v138, %v143
    %v148 = vadd.f32 %v132, %v144
    %v149 = vadd.f32 %v133, %v145
    %v150 = vadd.f32 %v134, %v146
    %v151 = vadd.f32 %v135, %v147
    %152 = vset.pattern.permute.xlu0 2
    %153 = vperm.xlu0 %152, %v81
    %v154 = vpop.permute.xlu0 %153
    %v156 = vperm.slane %v119, 2
    %v157 = vperm.slane %v120, 2
    %v158 = vperm.slane %v121, 2
    %v159 = vperm.slane %v122, 2
    %v160 = vmul.f32 %v154, %v156
    %v161 = vmul.f32 %v154, %v157
    %v162 = vmul.f32 %v154, %v158
    %v163 = vmul.f32 %v154, %v159
    %v164 = vadd.f32 %v148, %v160
    %v165 = vadd.f32 %v149, %v161
    %v166 = vadd.f32 %v150, %v162
    %v167 = vadd.f32 %v151, %v163
    %168 = vset.pattern.permute.xlu0 3
    %169 = vperm.xlu0 %168, %v81
    %v170 = vpop.permute.xlu0 %169
    %v172 = vperm.slane %v119, 3
    %v173 = vperm.slane %v120, 3
    %v174 = vperm.slane %v121, 3
    %v175 = vperm.slane %v122, 3
    %v176 = vmul.f32 %v170, %v172
    %v177 = vmul.f32 %v170, %v173
    %v178 = vmul.f32 %v170, %v174
    %v179 = vmul.f32 %v170, %v175
    %v180 = vadd.f32 %v164, %v176
    %v181 = vadd.f32 %v165, %v177
    %v182 = vadd.f32 %v166, %v178
    %v183 = vadd.f32 %v167, %v179
    %184 = vst [vmem:[#allocation1] ss:$2 sm:$0xff] %v79
    %s185 = scalar_lea.vmem [#allocation1], 16
    %186 = vst [vmem:[%s185] ss:$2 sm:$0xff] %v80
    %v187 = vld.sshfl [vmem:[#allocation1] sm:$0xff pattern:$0x75316420]
    %v188 = vld.sshfl [vmem:[#allocation1 + $0x8] sm:$0xff pattern:$0x75316420]
    %v189 = vld.sshfl [vmem:[#allocation1 + $0x10] sm:$0xff pattern:$0x75316420]
    %v190 = vld.sshfl [vmem:[#allocation1 + $0x18] sm:$0xff pattern:$0x75316420]
    %195 = vrot.lane.b32.xlu0 %v187, 16
    %v196 = vpop.permute.xlu0 %195
    %197 = vrot.lane.b32.xlu0 %v188, 16
    %v198 = vpop.permute.xlu0 %197
    %199 = vrot.lane.b32.xlu0 %v189, 16
    %v200 = vpop.permute.xlu0 %199
    %201 = vrot.lane.b32.xlu0 %v190, 16
    %v202 = vpop.permute.xlu0 %201
    %vm203 = vcmp.lt.s32.totalorder %v104, 16
    %v204 = vsel %vm203, %v200, %v202
    %v205 = vsel %vm203, %v198, %v200
    %v206 = vsel %vm203, %v196, %v198
    %v207 = vsel %vm203, %v202, %v196
    %v209 = vperm.slane %v61, 0
    %v210 = vperm.slane %v61, 1
    %v211 = vperm.slane %v61, 2
    %v212 = vperm.slane %v61, 3
    %v217 = vmul.f32 %v207, %v209
    %v218 = vmul.f32 %v206, %v210
    %v219 = vmul.f32 %v205, %v211
    %v220 = vmul.f32 %v204, %v212
    %221 = vset.pattern.permute.xlu0 4
    %222 = vperm.xlu0 %221, %v81
    %v223 = vpop.permute.xlu0 %222
    %v225 = vperm.slane %v217, 0
    %v226 = vperm.slane %v218, 0
    %v227 = vperm.slane %v219, 0
    %v228 = vperm.slane %v220, 0
    %v229 = vmul.f32 %v223, %v225
    %v230 = vmul.f32 %v223, %v226
    %v231 = vmul.f32 %v223, %v227
    %v232 = vmul.f32 %v223, %v228
    %v233 = vadd.f32 %v180, %v229
    %v234 = vadd.f32 %v181, %v230
    %v235 = vadd.f32 %v182, %v231
    %v236 = vadd.f32 %v183, %v232
    %237 = vset.pattern.permute.xlu0 5
    %238 = vperm.xlu0 %237, %v81
    %v239 = vpop.permute.xlu0 %238
    %v241 = vperm.slane %v217, 1
    %v242 = vperm.slane %v218, 1
    %v243 = vperm.slane %v219, 1
    %v244 = vperm.slane %v220, 1
    %v245 = vmul.f32 %v239, %v241
    %v246 = vmul.f32 %v239, %v242
    %v247 = vmul.f32 %v239, %v243
    %v248 = vmul.f32 %v239, %v244
    %v249 = vadd.f32 %v233, %v245
    %v250 = vadd.f32 %v234, %v246
    %v251 = vadd.f32 %v235, %v247
    %v252 = vadd.f32 %v236, %v248
    %253 = vset.pattern.permute.xlu0 6
    %254 = vperm.xlu0 %253, %v81
    %v255 = vpop.permute.xlu0 %254
    %v257 = vperm.slane %v217, 2
    %v258 = vperm.slane %v218, 2
    %v259 = vperm.slane %v219, 2
    %v260 = vperm.slane %v220, 2
    %v261 = vmul.f32 %v255, %v257
    %v262 = vmul.f32 %v255, %v258
    %v263 = vmul.f32 %v255, %v259
    %v264 = vmul.f32 %v255, %v260
    %v265 = vadd.f32 %v249, %v261
    %v266 = vadd.f32 %v250, %v262
    %v267 = vadd.f32 %v251, %v263
    %v268 = vadd.f32 %v252, %v264
    %269 = vset.pattern.permute.xlu0 7
    %270 = vperm.xlu0 %269, %v81
    %v271 = vpop.permute.xlu0 %270
    %v273 = vperm.slane %v217, 3
    %v274 = vperm.slane %v218, 3
    %v275 = vperm.slane %v219, 3
    %v276 = vperm.slane %v220, 3
    %v277 = vmul.f32 %v271, %v273
    %v278 = vmul.f32 %v271, %v274
    %v279 = vmul.f32 %v271, %v275
    %v280 = vmul.f32 %v271, %v276
    %v281 = vadd.f32 %v265, %v277
    %v282 = vadd.f32 %v266, %v278
    %v283 = vadd.f32 %v267, %v279
    %v284 = vadd.f32 %v268, %v280
    %285 = vst [vmem:[#allocation1] ss:$2 sm:$0xff] %v79
    %s286 = scalar_lea.vmem [#allocation1], 16
    %287 = vst [vmem:[%s286] ss:$2 sm:$0xff] %v80
    %v288 = vld.sshfl [vmem:[#allocation1] sm:$0xff pattern:$0x75316420]
    %v289 = vld.sshfl [vmem:[#allocation1 + $0x8] sm:$0xff pattern:$0x75316420]
    %v290 = vld.sshfl [vmem:[#allocation1 + $0x10] sm:$0xff pattern:$0x75316420]
    %v291 = vld.sshfl [vmem:[#allocation1 + $0x18] sm:$0xff pattern:$0x75316420]
    %296 = vrot.lane.b32.xlu0 %v288, 15
    %v297 = vpop.permute.xlu0 %296
    %298 = vrot.lane.b32.xlu0 %v289, 15
    %v299 = vpop.permute.xlu0 %298
    %300 = vrot.lane.b32.xlu0 %v290, 15
    %v301 = vpop.permute.xlu0 %300
    %302 = vrot.lane.b32.xlu0 %v291, 15
    %v303 = vpop.permute.xlu0 %302
    %vm304 = vcmp.lt.s32.totalorder %v104, 15
    %v305 = vsel %vm304, %v301, %v303
    %v306 = vsel %vm304, %v299, %v301
    %v307 = vsel %vm304, %v297, %v299
    %v308 = vsel %vm304, %v303, %v297
    %v310 = vperm.slane %v65, 0
    %v311 = vperm.slane %v65, 1
    %v312 = vperm.slane %v65, 2
    %v313 = vperm.slane %v65, 3
    %v318 = vmul.f32 %v308, %v310
    %v319 = vmul.f32 %v307, %v311
    %v320 = vmul.f32 %v306, %v312
    %v321 = vmul.f32 %v305, %v313
    %322 = vset.pattern.permute.xlu0 8
    %323 = vperm.xlu0 %322, %v81
    %v324 = vpop.permute.xlu0 %323
    %v326 = vperm.slane %v318, 0
    %v327 = vperm.slane %v319, 0
    %v328 = vperm.slane %v320, 0
    %v329 = vperm.slane %v321, 0
    %v330 = vmul.f32 %v324, %v326
    %v331 = vmul.f32 %v324, %v327
    %v332 = vmul.f32 %v324, %v328
    %v333 = vmul.f32 %v324, %v329
    %v334 = vadd.f32 %v281, %v330
    %v335 = vadd.f32 %v282, %v331
    %v336 = vadd.f32 %v283, %v332
    %v337 = vadd.f32 %v284, %v333
    %338 = vset.pattern.permute.xlu0 9
    %339 = vperm.xlu0 %338, %v81
    %v340 = vpop.permute.xlu0 %339
    %v342 = vperm.slane %v318, 1
    %v343 = vperm.slane %v319, 1
    %v344 = vperm.slane %v320, 1
    %v345 = vperm.slane %v321, 1
    %v346 = vmul.f32 %v340, %v342
    %v347 = vmul.f32 %v340, %v343
    %v348 = vmul.f32 %v340, %v344
    %v349 = vmul.f32 %v340, %v345
    %v350 = vadd.f32 %v334, %v346
    %v351 = vadd.f32 %v335, %v347
    %v352 = vadd.f32 %v336, %v348
    %v353 = vadd.f32 %v337, %v349
    %354 = vset.pattern.permute.xlu0 10
    %355 = vperm.xlu0 %354, %v81
    %v356 = vpop.permute.xlu0 %355
    %v358 = vperm.slane %v318, 2
    %v359 = vperm.slane %v319, 2
    %v360 = vperm.slane %v320, 2
    %v361 = vperm.slane %v321, 2
    %v362 = vmul.f32 %v356, %v358
    %v363 = vmul.f32 %v356, %v359
    %v364 = vmul.f32 %v356, %v360
    %v365 = vmul.f32 %v356, %v361
    %v366 = vadd.f32 %v350, %v362
    %v367 = vadd.f32 %v351, %v363
    %v368 = vadd.f32 %v352, %v364
    %v369 = vadd.f32 %v353, %v365
    %370 = vset.pattern.permute.xlu0 11
    %371 = vperm.xlu0 %370, %v81
    %v372 = vpop.permute.xlu0 %371
    %v374 = vperm.slane %v318, 3
    %v375 = vperm.slane %v319, 3
    %v376 = vperm.slane %v320, 3
    %v377 = vperm.slane %v321, 3
    %v378 = vmul.f32 %v372, %v374
    %v379 = vmul.f32 %v372, %v375
    %v380 = vmul.f32 %v372, %v376
    %v381 = vmul.f32 %v372, %v377
    %v382 = vadd.f32 %v366, %v378
    %v383 = vadd.f32 %v367, %v379
    %v384 = vadd.f32 %v368, %v380
    %v385 = vadd.f32 %v369, %v381
    %386 = vst [vmem:[#allocation1] ss:$2 sm:$0xff] %v79
    %s387 = scalar_lea.vmem [#allocation1], 16
    %388 = vst [vmem:[%s387] ss:$2 sm:$0xff] %v80
    %v389 = vld.sshfl [vmem:[#allocation1] sm:$0xff pattern:$0x75316420]
    %v390 = vld.sshfl [vmem:[#allocation1 + $0x8] sm:$0xff pattern:$0x75316420]
    %v391 = vld.sshfl [vmem:[#allocation1 + $0x10] sm:$0xff pattern:$0x75316420]
    %v392 = vld.sshfl [vmem:[#allocation1 + $0x18] sm:$0xff pattern:$0x75316420]
    %397 = vrot.lane.b32.xlu0 %v389, 1
    %v398 = vpop.permute.xlu0 %397
    %399 = vrot.lane.b32.xlu0 %v390, 1
    %v400 = vpop.permute.xlu0 %399
    %401 = vrot.lane.b32.xlu0 %v391, 1
    %v402 = vpop.permute.xlu0 %401
    %403 = vrot.lane.b32.xlu0 %v392, 1
    %v404 = vpop.permute.xlu0 %403
    %vm405 = vcmp.lt.s32.totalorder %v104, 1
    %v406 = vsel %vm405, %v402, %v404
    %v407 = vsel %vm405, %v400, %v402
    %v408 = vsel %vm405, %v398, %v400
    %v409 = vsel %vm405, %v404, %v398
    %v411 = vperm.slane %v67, 0
    %v412 = vperm.slane %v67, 1
    %v413 = vperm.slane %v67, 2
    %v414 = vperm.slane %v67, 3
    %v419 = vmul.f32 %v409, %v411
    %v420 = vmul.f32 %v408, %v412
    %v421 = vmul.f32 %v407, %v413
    %v422 = vmul.f32 %v406, %v414
    %423 = vset.pattern.permute.xlu0 12
    %424 = vperm.xlu0 %423, %v81
    %v425 = vpop.permute.xlu0 %424
    %v427 = vperm.slane %v419, 0
    %v428 = vperm.slane %v420, 0
    %v429 = vperm.slane %v421, 0
    %v430 = vperm.slane %v422, 0
    %v431 = vmul.f32 %v425, %v427
    %v432 = vmul.f32 %v425, %v428
    %v433 = vmul.f32 %v425, %v429
    %v434 = vmul.f32 %v425, %v430
    %v435 = vadd.f32 %v382, %v431
    %v436 = vadd.f32 %v383, %v432
    %v437 = vadd.f32 %v384, %v433
    %v438 = vadd.f32 %v385, %v434
    %439 = vset.pattern.permute.xlu0 13
    %440 = vperm.xlu0 %439, %v81
    %v441 = vpop.permute.xlu0 %440
    %v443 = vperm.slane %v419, 1
    %v444 = vperm.slane %v420, 1
    %v445 = vperm.slane %v421, 1
    %v446 = vperm.slane %v422, 1
    %v447 = vmul.f32 %v441, %v443
    %v448 = vmul.f32 %v441, %v444
    %v449 = vmul.f32 %v441, %v445
    %v450 = vmul.f32 %v441, %v446
    %v451 = vadd.f32 %v435, %v447
    %v452 = vadd.f32 %v436, %v448
    %v453 = vadd.f32 %v437, %v449
    %v454 = vadd.f32 %v438, %v450
    %455 = vset.pattern.permute.xlu0 14
    %456 = vperm.xlu0 %455, %v81
    %v457 = vpop.permute.xlu0 %456
    %v459 = vperm.slane %v419, 2
    %v460 = vperm.slane %v420, 2
    %v461 = vperm.slane %v421, 2
    %v462 = vperm.slane %v422, 2
    %v463 = vmul.f32 %v457, %v459
    %v464 = vmul.f32 %v457, %v460
    %v465 = vmul.f32 %v457, %v461
    %v466 = vmul.f32 %v457, %v462
    %v467 = vadd.f32 %v451, %v463
    %v468 = vadd.f32 %v452, %v464
    %v469 = vadd.f32 %v453, %v465
    %v470 = vadd.f32 %v454, %v466
    %471 = vset.pattern.permute.xlu0 15
    %472 = vperm.xlu0 %471, %v81
    %v473 = vpop.permute.xlu0 %472
    %v475 = vperm.slane %v419, 3
    %v476 = vperm.slane %v420, 3
    %v477 = vperm.slane %v421, 3
    %v478 = vperm.slane %v422, 3
    %v479 = vmul.f32 %v473, %v475
    %v480 = vmul.f32 %v473, %v476
    %v481 = vmul.f32 %v473, %v477
    %v482 = vmul.f32 %v473, %v478
    %v483 = vadd.f32 %v467, %v479
    %v484 = vadd.f32 %v468, %v480
    %v485 = vadd.f32 %v469, %v481
    %v486 = vadd.f32 %v470, %v482
    %487 = vset.pattern.permute.xlu0 16
    %488 = vperm.xlu0 %487, %v81
    %v489 = vpop.permute.xlu0 %488
    %v491 = vperm.slane %v79, 0
    %v492 = vperm.slane %v79, 4
    %v493 = vperm.slane %v80, 0
    %v494 = vperm.slane %v80, 4
    %v499 = vperm.slane %v491, 0
    %v500 = vperm.slane %v492, 0
    %v501 = vperm.slane %v493, 0
    %v502 = vperm.slane %v494, 0
    %v503 = vmul.f32 %v489, %v499
    %v504 = vmul.f32 %v489, %v500
    %v505 = vmul.f32 %v489, %v501
    %v506 = vmul.f32 %v489, %v502
    %v507 = vadd.f32 %v483, %v503
    %v508 = vadd.f32 %v484, %v504
    %v509 = vadd.f32 %v485, %v505
    %v510 = vadd.f32 %v486, %v506
    %511 = vset.pattern.permute.xlu0 17
    %512 = vperm.xlu0 %511, %v81
    %v513 = vpop.permute.xlu0 %512
    %v515 = vperm.slane %v79, 1
    %v516 = vperm.slane %v79, 5
    %v517 = vperm.slane %v80, 1
    %v518 = vperm.slane %v80, 5
    %v523 = vperm.slane %v515, 1
    %v524 = vperm.slane %v516, 1
    %v525 = vperm.slane %v517, 1
    %v526 = vperm.slane %v518, 1
    %v527 = vmul.f32 %v513, %v523
    %v528 = vmul.f32 %v513, %v524
    %v529 = vmul.f32 %v513, %v525
    %v530 = vmul.f32 %v513, %v526
    %v531 = vadd.f32 %v507, %v527
    %v532 = vadd.f32 %v508, %v528
    %v533 = vadd.f32 %v509, %v529
    %v534 = vadd.f32 %v510, %v530
    %535 = vset.pattern.permute.xlu0 18
    %536 = vperm.xlu0 %535, %v81
    %v537 = vpop.permute.xlu0 %536
    %v539 = vperm.slane %v79, 2
    %v540 = vperm.slane %v79, 6
    %v541 = vperm.slane %v80, 2
    %v542 = vperm.slane %v80, 6
    %v547 = vperm.slane %v539, 2
    %v548 = vperm.slane %v540, 2
    %v549 = vperm.slane %v541, 2
    %v550 = vperm.slane %v542, 2
    %v551 = vmul.f32 %v537, %v547
    %v552 = vmul.f32 %v537, %v548
    %v553 = vmul.f32 %v537, %v549
    %v554 = vmul.f32 %v537, %v550
    %v555 = vadd.f32 %v531, %v551
    %v556 = vadd.f32 %v532, %v552
    %v557 = vadd.f32 %v533, %v553
    %v558 = vadd.f32 %v534, %v554
    %559 = vset.pattern.permute.xlu0 19
    %560 = vperm.xlu0 %559, %v81
    %v561 = vpop.permute.xlu0 %560
    %v563 = vperm.slane %v79, 3
    %v564 = vperm.slane %v79, 7
    %v565 = vperm.slane %v80, 3
    %v566 = vperm.slane %v80, 7
    %v571 = vperm.slane %v563, 3
    %v572 = vperm.slane %v564, 3
    %v573 = vperm.slane %v565, 3
    %v574 = vperm.slane %v566, 3
    %v575 = vmul.f32 %v561, %v571
    %v576 = vmul.f32 %v561, %v572
    %v577 = vmul.f32 %v561, %v573
    %v578 = vmul.f32 %v561, %v574
    %v579 = vadd.f32 %v555, %v575
    %v580 = vadd.f32 %v556, %v576
    %v581 = vadd.f32 %v557, %v577
    %v582 = vadd.f32 %v558, %v578
    %583 = vst [vmem:[#allocation1] ss:$2 sm:$0xff] %v79
    %s584 = scalar_lea.vmem [#allocation1], 16
    %585 = vst [vmem:[%s584] ss:$2 sm:$0xff] %v80
    %v586 = vld.sshfl [vmem:[#allocation1] sm:$0xff pattern:$0x75316420]
    %v587 = vld.sshfl [vmem:[#allocation1 + $0x8] sm:$0xff pattern:$0x75316420]
    %v588 = vld.sshfl [vmem:[#allocation1 + $0x10] sm:$0xff pattern:$0x75316420]
    %v589 = vld.sshfl [vmem:[#allocation1 + $0x18] sm:$0xff pattern:$0x75316420]
    %594 = vrot.lane.b32.xlu0 %v586, 127
    %v595 = vpop.permute.xlu0 %594
    %596 = vrot.lane.b32.xlu0 %v587, 127
    %v597 = vpop.permute.xlu0 %596
    %598 = vrot.lane.b32.xlu0 %v588, 127
    %v599 = vpop.permute.xlu0 %598
    %600 = vrot.lane.b32.xlu0 %v589, 127
    %v601 = vpop.permute.xlu0 %600
    %vm602 = vcmp.lt.s32.totalorder %v104, 127
    %v603 = vsel %vm602, %v599, %v601
    %v604 = vsel %vm602, %v597, %v599
    %v605 = vsel %vm602, %v595, %v597
    %v606 = vsel %vm602, %v601, %v595
    %v608 = vperm.slane %v69, 0
    %v609 = vperm.slane %v69, 1
    %v610 = vperm.slane %v69, 2
    %v611 = vperm.slane %v69, 3
    %v616 = vmul.f32 %v605, %v608
    %v617 = vmul.f32 %v604, %v609
    %v618 = vmul.f32 %v603, %v610
    %v619 = vmul.f32 %v606, %v611
    %620 = vset.pattern.permute.xlu0 20
    %621 = vperm.xlu0 %620, %v81
    %v622 = vpop.permute.xlu0 %621
    %v624 = vperm.slane %v616, 0
    %v625 = vperm.slane %v617, 0
    %v626 = vperm.slane %v618, 0
    %v627 = vperm.slane %v619, 0
    %v628 = vmul.f32 %v622, %v624
    %v629 = vmul.f32 %v622, %v625
    %v630 = vmul.f32 %v622, %v626
    %v631 = vmul.f32 %v622, %v627
    %v632 = vadd.f32 %v579, %v628
    %v633 = vadd.f32 %v580, %v629
    %v634 = vadd.f32 %v581, %v630
    %v635 = vadd.f32 %v582, %v631
    %636 = vset.pattern.permute.xlu0 21
    %637 = vperm.xlu0 %636, %v81
    %v638 = vpop.permute.xlu0 %637
    %v640 = vperm.slane %v616, 1
    %v641 = vperm.slane %v617, 1
    %v642 = vperm.slane %v618, 1
    %v643 = vperm.slane %v619, 1
    %v644 = vmul.f32 %v638, %v640
    %v645 = vmul.f32 %v638, %v641
    %v646 = vmul.f32 %v638, %v642
    %v647 = vmul.f32 %v638, %v643
    %v648 = vadd.f32 %v632, %v644
    %v649 = vadd.f32 %v633, %v645
    %v650 = vadd.f32 %v634, %v646
    %v651 = vadd.f32 %v635, %v647
    %652 = vset.pattern.permute.xlu0 22
    %653 = vperm.xlu0 %652, %v81
    %v654 = vpop.permute.xlu0 %653
    %v656 = vperm.slane %v616, 2
    %v657 = vperm.slane %v617, 2
    %v658 = vperm.slane %v618, 2
    %v659 = vperm.slane %v619, 2
    %v660 = vmul.f32 %v654, %v656
    %v661 = vmul.f32 %v654, %v657
    %v662 = vmul.f32 %v654, %v658
    %v663 = vmul.f32 %v654, %v659
    %v664 = vadd.f32 %v648, %v660
    %v665 = vadd.f32 %v649, %v661
    %v666 = vadd.f32 %v650, %v662
    %v667 = vadd.f32 %v651, %v663
    %668 = vset.pattern.permute.xlu0 23
    %669 = vperm.xlu0 %668, %v81
    %v670 = vpop.permute.xlu0 %669
    %v672 = vperm.slane %v616, 3
    %v673 = vperm.slane %v617, 3
    %v674 = vperm.slane %v618, 3
    %v675 = vperm.slane %v619, 3
    %v676 = vmul.f32 %v670, %v672
    %v677 = vmul.f32 %v670, %v673
    %v678 = vmul.f32 %v670, %v674
    %v679 = vmul.f32 %v670, %v675
    %v680 = vadd.f32 %v664, %v676
    %v681 = vadd.f32 %v665, %v677
    %v682 = vadd.f32 %v666, %v678
    %v683 = vadd.f32 %v667, %v679
    %684 = vst [vmem:[#allocation1] ss:$2 sm:$0xff] %v79
    %s685 = scalar_lea.vmem [#allocation1], 16
    %686 = vst [vmem:[%s685] ss:$2 sm:$0xff] %v80
    %v687 = vld.sshfl [vmem:[#allocation1] sm:$0xff pattern:$0x75316420]
    %v688 = vld.sshfl [vmem:[#allocation1 + $0x8] sm:$0xff pattern:$0x75316420]
    %v689 = vld.sshfl [vmem:[#allocation1 + $0x10] sm:$0xff pattern:$0x75316420]
    %v690 = vld.sshfl [vmem:[#allocation1 + $0x18] sm:$0xff pattern:$0x75316420]
    %695 = vrot.lane.b32.xlu0 %v687, 113
    %v696 = vpop.permute.xlu0 %695
    %697 = vrot.lane.b32.xlu0 %v688, 113
    %v698 = vpop.permute.xlu0 %697
    %699 = vrot.lane.b32.xlu0 %v689, 113
    %v700 = vpop.permute.xlu0 %699
    %701 = vrot.lane.b32.xlu0 %v690, 113
    %v702 = vpop.permute.xlu0 %701
    %vm703 = vcmp.lt.s32.totalorder %v104, 113
    %v704 = vsel %vm703, %v700, %v702
    %v705 = vsel %vm703, %v698, %v700
    %v706 = vsel %vm703, %v696, %v698
    %v707 = vsel %vm703, %v702, %v696
    %v709 = vperm.slane %v73, 0
    %v710 = vperm.slane %v73, 1
    %v711 = vperm.slane %v73, 2
    %v712 = vperm.slane %v73, 3
    %v717 = vmul.f32 %v706, %v709
    %v718 = vmul.f32 %v705, %v710
    %v719 = vmul.f32 %v704, %v711
    %v720 = vmul.f32 %v707, %v712
    %721 = vset.pattern.permute.xlu0 24
    %722 = vperm.xlu0 %721, %v81
    %v723 = vpop.permute.xlu0 %722
    %v725 = vperm.slane %v717, 0
    %v726 = vperm.slane %v718, 0
    %v727 = vperm.slane %v719, 0
    %v728 = vperm.slane %v720, 0
    %v729 = vmul.f32 %v723, %v725
    %v730 = vmul.f32 %v723, %v726
    %v731 = vmul.f32 %v723, %v727
    %v732 = vmul.f32 %v723, %v728
    %v733 = vadd.f32 %v680, %v729
    %v734 = vadd.f32 %v681, %v730
    %v735 = vadd.f32 %v682, %v731
    %v736 = vadd.f32 %v683, %v732
    %737 = vset.pattern.permute.xlu0 25
    %738 = vperm.xlu0 %737, %v81
    %v739 = vpop.permute.xlu0 %738
    %v741 = vperm.slane %v717, 1
    %v742 = vperm.slane %v718, 1
    %v743 = vperm.slane %v719, 1
    %v744 = vperm.slane %v720, 1
    %v745 = vmul.f32 %v739, %v741
    %v746 = vmul.f32 %v739, %v742
    %v747 = vmul.f32 %v739, %v743
    %v748 = vmul.f32 %v739, %v744
    %v749 = vadd.f32 %v733, %v745
    %v750 = vadd.f32 %v734, %v746
    %v751 = vadd.f32 %v735, %v747
    %v752 = vadd.f32 %v736, %v748
    %753 = vset.pattern.permute.xlu0 26
    %754 = vperm.xlu0 %753, %v81
    %v755 = vpop.permute.xlu0 %754
    %v757 = vperm.slane %v717, 2
    %v758 = vperm.slane %v718, 2
    %v759 = vperm.slane %v719, 2
    %v760 = vperm.slane %v720, 2
    %v761 = vmul.f32 %v755, %v757
    %v762 = vmul.f32 %v755, %v758
    %v763 = vmul.f32 %v755, %v759
    %v764 = vmul.f32 %v755, %v760
    %v765 = vadd.f32 %v749, %v761
    %v766 = vadd.f32 %v750, %v762
    %v767 = vadd.f32 %v751, %v763
    %v768 = vadd.f32 %v752, %v764
    %769 = vset.pattern.permute.xlu0 27
    %770 = vperm.xlu0 %769, %v81
    %v771 = vpop.permute.xlu0 %770
    %v773 = vperm.slane %v717, 3
    %v774 = vperm.slane %v718, 3
    %v775 = vperm.slane %v719, 3
    %v776 = vperm.slane %v720, 3
    %v777 = vmul.f32 %v771, %v773
    %v778 = vmul.f32 %v771, %v774
    %v779 = vmul.f32 %v771, %v775
    %v780 = vmul.f32 %v771, %v776
    %v781 = vadd.f32 %v765, %v777
    %v782 = vadd.f32 %v766, %v778
    %v783 = vadd.f32 %v767, %v779
    %v784 = vadd.f32 %v768, %v780
    %785 = vst [vmem:[#allocation1] ss:$2 sm:$0xff] %v79
    %s786 = scalar_lea.vmem [#allocation1], 16
    %787 = vst [vmem:[%s786] ss:$2 sm:$0xff] %v80
    %v788 = vld.sshfl [vmem:[#allocation1] sm:$0xff pattern:$0x75316420]
    %v789 = vld.sshfl [vmem:[#allocation1 + $0x8] sm:$0xff pattern:$0x75316420]
    %v790 = vld.sshfl [vmem:[#allocation1 + $0x10] sm:$0xff pattern:$0x75316420]
    %v791 = vld.sshfl [vmem:[#allocation1 + $0x18] sm:$0xff pattern:$0x75316420]
    %796 = vrot.lane.b32.xlu0 %v788, 112
    %v797 = vpop.permute.xlu0 %796
    %798 = vrot.lane.b32.xlu0 %v789, 112
    %v799 = vpop.permute.xlu0 %798
    %800 = vrot.lane.b32.xlu0 %v790, 112
    %v801 = vpop.permute.xlu0 %800
    %802 = vrot.lane.b32.xlu0 %v791, 112
    %v803 = vpop.permute.xlu0 %802
    %vm804 = vcmp.lt.s32.totalorder %v104, 112
    %v805 = vsel %vm804, %v801, %v803
    %v806 = vsel %vm804, %v799, %v801
    %v807 = vsel %vm804, %v797, %v799
    %v808 = vsel %vm804, %v803, %v797
    %v810 = vperm.slane %v75, 0
    %v811 = vperm.slane %v75, 1
    %v812 = vperm.slane %v75, 2
    %v813 = vperm.slane %v75, 3
    %v818 = vmul.f32 %v807, %v810
    %v819 = vmul.f32 %v806, %v811
    %v820 = vmul.f32 %v805, %v812
    %v821 = vmul.f32 %v808, %v813
    %822 = vset.pattern.permute.xlu0 28
    %823 = vperm.xlu0 %822, %v81
    %v824 = vpop.permute.xlu0 %823
    %v826 = vperm.slane %v818, 0
    %v827 = vperm.slane %v819, 0
    %v828 = vperm.slane %v820, 0
    %v829 = vperm.slane %v821, 0
    %v830 = vmul.f32 %v824, %v826
    %v831 = vmul.f32 %v824, %v827
    %v832 = vmul.f32 %v824, %v828
    %v833 = vmul.f32 %v824, %v829
    %v834 = vadd.f32 %v781, %v830
    %v835 = vadd.f32 %v782, %v831
    %v836 = vadd.f32 %v783, %v832
    %v837 = vadd.f32 %v784, %v833
    %838 = vset.pattern.permute.xlu0 29
    %839 = vperm.xlu0 %838, %v81
    %v840 = vpop.permute.xlu0 %839
    %v842 = vperm.slane %v818, 1
    %v843 = vperm.slane %v819, 1
    %v844 = vperm.slane %v820, 1
    %v845 = vperm.slane %v821, 1
    %v846 = vmul.f32 %v840, %v842
    %v847 = vmul.f32 %v840, %v843
    %v848 = vmul.f32 %v840, %v844
    %v849 = vmul.f32 %v840, %v845
    %v850 = vadd.f32 %v834, %v846
    %v851 = vadd.f32 %v835, %v847
    %v852 = vadd.f32 %v836, %v848
    %v853 = vadd.f32 %v837, %v849
    %854 = vset.pattern.permute.xlu0 30
    %855 = vperm.xlu0 %854, %v81
    %v856 = vpop.permute.xlu0 %855
    %v858 = vperm.slane %v818, 2
    %v859 = vperm.slane %v819, 2
    %v860 = vperm.slane %v820, 2
    %v861 = vperm.slane %v821, 2
    %v862 = vmul.f32 %v856, %v858
    %v863 = vmul.f32 %v856, %v859
    %v864 = vmul.f32 %v856, %v860
    %v865 = vmul.f32 %v856, %v861
    %v866 = vadd.f32 %v850, %v862
    %v867 = vadd.f32 %v851, %v863
    %v868 = vadd.f32 %v852, %v864
    %v869 = vadd.f32 %v853, %v865
    %870 = vset.pattern.permute.xlu0 31
    %871 = vperm.xlu0 %870, %v81
    %v872 = vpop.permute.xlu0 %871
    %v874 = vperm.slane %v818, 3
    %v875 = vperm.slane %v819, 3
    %v876 = vperm.slane %v820, 3
    %v877 = vperm.slane %v821, 3
    %v878 = vmul.f32 %v872, %v874
    %v879 = vmul.f32 %v872, %v875
    %v880 = vmul.f32 %v872, %v876
    %v881 = vmul.f32 %v872, %v877
    %v882 = vadd.f32 %v866, %v878
    %v883 = vadd.f32 %v867, %v879
    %v884 = vadd.f32 %v868, %v880
    %v885 = vadd.f32 %v869, %v881
    %886 = vst [vmem:[#allocation1] ss:$2 sm:$0xff] %v79
    %s887 = scalar_lea.vmem [#allocation1], 16
    %888 = vst [vmem:[%s887] ss:$2 sm:$0xff] %v80
    %v889 = vld.sshfl [vmem:[#allocation1] sm:$0xff pattern:$0x75316420]
    %v890 = vld.sshfl [vmem:[#allocation1 + $0x8] sm:$0xff pattern:$0x75316420]
    %v891 = vld.sshfl [vmem:[#allocation1 + $0x10] sm:$0xff pattern:$0x75316420]
    %v892 = vld.sshfl [vmem:[#allocation1 + $0x18] sm:$0xff pattern:$0x75316420]
    %897 = vrot.lane.b32.xlu0 %v889, 111
    %v898 = vpop.permute.xlu0 %897
    %899 = vrot.lane.b32.xlu0 %v890, 111
    %v900 = vpop.permute.xlu0 %899
    %901 = vrot.lane.b32.xlu0 %v891, 111
    %v902 = vpop.permute.xlu0 %901
    %903 = vrot.lane.b32.xlu0 %v892, 111
    %v904 = vpop.permute.xlu0 %903
    %vm905 = vcmp.lt.s32.totalorder %v104, 111
    %v906 = vsel %vm905, %v902, %v904
    %v907 = vsel %vm905, %v900, %v902
    %v908 = vsel %vm905, %v898, %v900
    %v909 = vsel %vm905, %v904, %v898
    %v911 = vperm.slane %v78, 0
    %v912 = vperm.slane %v78, 1
    %v913 = vperm.slane %v78, 2
    %v914 = vperm.slane %v78, 3
    %v919 = vmul.f32 %v908, %v911
    %v920 = vmul.f32 %v907, %v912
    %v921 = vmul.f32 %v906, %v913
    %v922 = vmul.f32 %v909, %v914
    %923 = vset.pattern.permute.xlu0 32
    %924 = vperm.xlu0 %923, %v81
    %v925 = vpop.permute.xlu0 %924
    %v927 = vperm.slane %v919, 0
    %v928 = vperm.slane %v920, 0
    %v929 = vperm.slane %v921, 0
    %v930 = vperm.slane %v922, 0
    %v931 = vmul.f32 %v925, %v927
    %v932 = vmul.f32 %v925, %v928
    %v933 = vmul.f32 %v925, %v929
    %v934 = vmul.f32 %v925, %v930
    %v935 = vadd.f32 %v882, %v931
    %v936 = vadd.f32 %v883, %v932
    %v937 = vadd.f32 %v884, %v933
    %v938 = vadd.f32 %v885, %v934
    %939 = vset.pattern.permute.xlu0 33
    %940 = vperm.xlu0 %939, %v81
    %v941 = vpop.permute.xlu0 %940
    %v943 = vperm.slane %v919, 1
    %v944 = vperm.slane %v920, 1
    %v945 = vperm.slane %v921, 1
    %v946 = vperm.slane %v922, 1
    %v947 = vmul.f32 %v941, %v943
    %v948 = vmul.f32 %v941, %v944
    %v949 = vmul.f32 %v941, %v945
    %v950 = vmul.f32 %v941, %v946
    %v951 = vadd.f32 %v935, %v947
    %v952 = vadd.f32 %v936, %v948
    %v953 = vadd.f32 %v937, %v949
    %v954 = vadd.f32 %v938, %v950
    %955 = vset.pattern.permute.xlu0 34
    %956 = vperm.xlu0 %955, %v81
    %v957 = vpop.permute.xlu0 %956
    %v959 = vperm.slane %v919, 2
    %v960 = vperm.slane %v920, 2
    %v961 = vperm.slane %v921, 2
    %v962 = vperm.slane %v922, 2
    %v963 = vmul.f32 %v957, %v959
    %v964 = vmul.f32 %v957, %v960
    %v965 = vmul.f32 %v957, %v961
    %v966 = vmul.f32 %v957, %v962
    %v967 = vadd.f32 %v951, %v963
    %v968 = vadd.f32 %v952, %v964
    %v969 = vadd.f32 %v953, %v965
    %v970 = vadd.f32 %v954, %v966
    %971 = vset.pattern.permute.xlu0 35
    %972 = vperm.xlu0 %971, %v81
    %v973 = vpop.permute.xlu0 %972
    %v975 = vperm.slane %v919, 3
    %v976 = vperm.slane %v920, 3
    %v977 = vperm.slane %v921, 3
    %v978 = vperm.slane %v922, 3
    %v979 = vmul.f32 %v973, %v975
    %v980 = vmul.f32 %v973, %v976
    %v981 = vmul.f32 %v973, %v977
    %v982 = vmul.f32 %v973, %v978
    %v983 = vadd.f32 %v967, %v979
    %v984 = vadd.f32 %v968, %v980
    %v985 = vadd.f32 %v969, %v981
    %v986 = vadd.f32 %v970, %v982
    %v987 = vld [vmem:[%s4] sm:$0xf]
    %989 = vset.pattern.permute.xlu0 0
    %990 = vperm.xlu0 %989, %v987
    %v991 = vpop.permute.xlu0 %990
    %v993 = vadd.f32 %v983, %v991
    %v994 = vadd.f32 %v984, %v991
    %v995 = vadd.f32 %v985, %v991
    %v996 = vadd.f32 %v986, %v991
    %vm997 = vcmask 1043456
    %v998 = vsel %vm997, %v993, 0.0
    %v999 = vsel %vm997, %v994, 0.0
    %v1000 = vadd.f32 %v998, %v999
    %v1001 = vsel %vm997, %v995, 0.0
    %v1002 = vadd.f32 %v1000, %v1001
    %v1003 = vsel %vm997, %v996, 0.0
    %v1004 = vadd.f32 %v1002, %v1003
    %1005 = vadd.xlane.f32.xlu0 %v1004
    %v1006 = vpop.xlane.xlu0 %1005
    %v1007 = vmul.f32 %v1006, 0.001953125
    %v1008 = vsub.f32 %v993, %v1007
    %v1009 = vsub.f32 %v994, %v1007
    %v1010 = vsub.f32 %v995, %v1007
    %v1011 = vsub.f32 %v996, %v1007
    %v1012 = vmul.f32 %v1008, %v1008
    %v1013 = vmul.f32 %v1009, %v1009
    %v1014 = vmul.f32 %v1010, %v1010
    %v1015 = vmul.f32 %v1011, %v1011
    %v1016 = vsel %vm997, %v1012, 0.0
    %v1017 = vsel %vm997, %v1013, 0.0
    %v1018 = vadd.f32 %v1016, %v1017
    %v1019 = vsel %vm997, %v1014, 0.0
    %v1020 = vadd.f32 %v1018, %v1019
    %v1021 = vsel %vm997, %v1015, 0.0
    %v1022 = vadd.f32 %v1020, %v1021
    %1023 = vadd.xlane.f32.xlu0 %v1022
    %v1024 = vpop.xlane.xlu0 %1023
    %v1025 = vmul.f32 %v1024, 0.001953125
    %v1026 = vadd.f32 %v1025, 1e-05
    %v1027 = vrsqrt.pop %v1026
    %v1028 = vmul.f32 %v1027, %v1026
    %v1029 = vmul.f32 %v1028, %v1027
    %v1030 = vmul.f32 0.5, %v1029
    %v1031 = vsub.f32 1.5, %v1030
    %v1032 = vmul.f32 %v1027, %v1031
    %vm1033 = vweird.f32 %v1026
    %vm1034 = vweird.f32 %v1027
    %vm1035 = vmor %vm1033, %vm1034
    %v1036 = vsel %vm1035, %v1027, %v1032
    %v1037 = vmul.f32 %v1008, %v1036
    %v1038 = vmul.f32 %v1009, %v1036
    %v1039 = vmul.f32 %v1010, %v1036
    %v1040 = vmul.f32 %v1011, %v1036
    %v1041 = vld [vmem:[%s5] sm:$0xf]
    %1043 = vset.pattern.permute.xlu0 0
    %1044 = vperm.xlu0 %1043, %v1041
    %v1045 = vpop.permute.xlu0 %1044
    %v1047 = vmul.f32 %v1037, %v1045
    %v1048 = vmul.f32 %v1038, %v1045
    %v1049 = vmul.f32 %v1039, %v1045
    %v1050 = vmul.f32 %v1040, %v1045
    %v1051 = vld [vmem:[%s6] sm:$0xf]
    %1053 = vset.pattern.permute.xlu0 0
    %1054 = vperm.xlu0 %1053, %v1051
    %v1055 = vpop.permute.xlu0 %1054
    %v1057 = vadd.f32 %v1047, %v1055
    %v1058 = vadd.f32 %v1048, %v1055
    %v1059 = vadd.f32 %v1049, %v1055
    %v1060 = vadd.f32 %v1050, %v1055
    %v1061 = vmax.f32 %v1057, 0.0
    %v1062 = vmax.f32 %v1058, 0.0
    %v1063 = vmax.f32 %v1059, 0.0
    %v1064 = vmax.f32 %v1060, 0.0
    %v1065 = vld [vmem:[%s7] sm:$0xf]
    %1066 = vrot.lane.b32.xlu0 %v1061, 17
    %v1067 = vpop.permute.xlu0 %1066
    %1068 = vrot.lane.b32.xlu0 %v1062, 17
    %v1069 = vpop.permute.xlu0 %1068
    %1070 = vrot.lane.b32.xlu0 %v1063, 17
    %v1071 = vpop.permute.xlu0 %1070
    %1072 = vrot.lane.b32.xlu0 %v1064, 17
    %v1073 = vpop.permute.xlu0 %1072
    %v1074 = vsel %vm105, %v1071, %v1073
    %v1075 = vsel %vm105, %v1069, %v1071
    %v1076 = vsel %vm105, %v1067, %v1069
    %v1077 = vsel %vm105, %v1073, %v1067
    %v1078 = vmul.f32 %v1077, %v111
    %v1079 = vmul.f32 %v1076, %v112
    %v1080 = vmul.f32 %v1075, %v113
    %v1081 = vmul.f32 %v1074, %v114
    %1083 = vset.pattern.permute.xlu0 0
    %1084 = vperm.xlu0 %1083, %v1065
    %v1085 = vpop.permute.xlu0 %1084
    %v1087 = vperm.slane %v1078, 0
    %v1088 = vperm.slane %v1079, 0
    %v1089 = vperm.slane %v1080, 0
    %v1090 = vperm.slane %v1081, 0
    %v1091 = vmul.f32 %v1085, %v1087
    %v1092 = vmul.f32 %v1085, %v1088
    %v1093 = vmul.f32 %v1085, %v1089
    %v1094 = vmul.f32 %v1085, %v1090
    %1095 = vset.pattern.permute.xlu0 1
    %1096 = vperm.xlu0 %1095, %v1065
    %v1097 = vpop.permute.xlu0 %1096
    %v1099 = vperm.slane %v1078, 1
    %v1100 = vperm.slane %v1079, 1
    %v1101 = vperm.slane %v1080, 1
    %v1102 = vperm.slane %v1081, 1
    %v1103 = vmul.f32 %v1097, %v1099
    %v1104 = vmul.f32 %v1097, %v1100
    %v1105 = vmul.f32 %v1097, %v1101
    %v1106 = vmul.f32 %v1097, %v1102
    %v1107 = vadd.f32 %v1091, %v1103
    %v1108 = vadd.f32 %v1092, %v1104
    %v1109 = vadd.f32 %v1093, %v1105
    %v1110 = vadd.f32 %v1094, %v1106
    %1111 = vset.pattern.permute.xlu0 2
    %1112 = vperm.xlu0 %1111, %v1065
    %v1113 = vpop.permute.xlu0 %1112
    %v1115 = vperm.slane %v1078, 2
    %v1116 = vperm.slane %v1079, 2
    %v1117 = vperm.slane %v1080, 2
    %v1118 = vperm.slane %v1081, 2
    %v1119 = vmul.f32 %v1113, %v1115
    %v1120 = vmul.f32 %v1113, %v1116
    %v1121 = vmul.f32 %v1113, %v1117
    %v1122 = vmul.f32 %v1113, %v1118
    %v1123 = vadd.f32 %v1107, %v1119
    %v1124 = vadd.f32 %v1108, %v1120
    %v1125 = vadd.f32 %v1109, %v1121
    %v1126 = vadd.f32 %v1110, %v1122
    %1127 = vset.pattern.permute.xlu0 3
    %1128 = vperm.xlu0 %1127, %v1065
    %v1129 = vpop.permute.xlu0 %1128
    %v1131 = vperm.slane %v1078, 3
    %v1132 = vperm.slane %v1079, 3
    %v1133 = vperm.slane %v1080, 3
    %v1134 = vperm.slane %v1081, 3
    %v1135 = vmul.f32 %v1129, %v1131
    %v1136 = vmul.f32 %v1129, %v1132
    %v1137 = vmul.f32 %v1129, %v1133
    %v1138 = vmul.f32 %v1129, %v1134
    %v1139 = vadd.f32 %v1123, %v1135
    %v1140 = vadd.f32 %v1124, %v1136
    %v1141 = vadd.f32 %v1125, %v1137
    %v1142 = vadd.f32 %v1126, %v1138
    %1143 = vrot.lane.b32.xlu0 %v1061, 16
    %v1144 = vpop.permute.xlu0 %1143
    %1145 = vrot.lane.b32.xlu0 %v1062, 16
    %v1146 = vpop.permute.xlu0 %1145
    %1147 = vrot.lane.b32.xlu0 %v1063, 16
    %v1148 = vpop.permute.xlu0 %1147
    %1149 = vrot.lane.b32.xlu0 %v1064, 16
    %v1150 = vpop.permute.xlu0 %1149
    %v1151 = vsel %vm203, %v1148, %v1150
    %v1152 = vsel %vm203, %v1146, %v1148
    %v1153 = vsel %vm203, %v1144, %v1146
    %v1154 = vsel %vm203, %v1150, %v1144
    %v1155 = vmul.f32 %v1154, %v209
    %v1156 = vmul.f32 %v1153, %v210
    %v1157 = vmul.f32 %v1152, %v211
    %v1158 = vmul.f32 %v1151, %v212
    %1159 = vset.pattern.permute.xlu0 4
    %1160 = vperm.xlu0 %1159, %v1065
    %v1161 = vpop.permute.xlu0 %1160
    %v1163 = vperm.slane %v1155, 0
    %v1164 = vperm.slane %v1156, 0
    %v1165 = vperm.slane %v1157, 0
    %v1166 = vperm.slane %v1158, 0
    %v1167 = vmul.f32 %v1161, %v1163
    %v1168 = vmul.f32 %v1161, %v1164
    %v1169 = vmul.f32 %v1161, %v1165
    %v1170 = vmul.f32 %v1161, %v1166
    %v1171 = vadd.f32 %v1139, %v1167
    %v1172 = vadd.f32 %v1140, %v1168
    %v1173 = vadd.f32 %v1141, %v1169
    %v1174 = vadd.f32 %v1142, %v1170
    %1175 = vset.pattern.permute.xlu0 5
    %1176 = vperm.xlu0 %1175, %v1065
    %v1177 = vpop.permute.xlu0 %1176
    %v1179 = vperm.slane %v1155, 1
    %v1180 = vperm.slane %v1156, 1
    %v1181 = vperm.slane %v1157, 1
    %v1182 = vperm.slane %v1158, 1
    %v1183 = vmul.f32 %v1177, %v1179
    %v1184 = vmul.f32 %v1177, %v1180
    %v1185 = vmul.f32 %v1177, %v1181
    %v1186 = vmul.f32 %v1177, %v1182
    %v1187 = vadd.f32 %v1171, %v1183
    %v1188 = vadd.f32 %v1172, %v1184
    %v1189 = vadd.f32 %v1173, %v1185
    %v1190 = vadd.f32 %v1174, %v1186
    %1191 = vset.pattern.permute.xlu0 6
    %1192 = vperm.xlu0 %1191, %v1065
    %v1193 = vpop.permute.xlu0 %1192
    %v1195 = vperm.slane %v1155, 2
    %v1196 = vperm.slane %v1156, 2
    %v1197 = vperm.slane %v1157, 2
    %v1198 = vperm.slane %v1158, 2
    %v1199 = vmul.f32 %v1193, %v1195
    %v1200 = vmul.f32 %v1193, %v1196
    %v1201 = vmul.f32 %v1193, %v1197
    %v1202 = vmul.f32 %v1193, %v1198
    %v1203 = vadd.f32 %v1187, %v1199
    %v1204 = vadd.f32 %v1188, %v1200
    %v1205 = vadd.f32 %v1189, %v1201
    %v1206 = vadd.f32 %v1190, %v1202
    %1207 = vset.pattern.permute.xlu0 7
    %1208 = vperm.xlu0 %1207, %v1065
    %v1209 = vpop.permute.xlu0 %1208
    %v1211 = vperm.slane %v1155, 3
    %v1212 = vperm.slane %v1156, 3
    %v1213 = vperm.slane %v1157, 3
    %v1214 = vperm.slane %v1158, 3
    %v1215 = vmul.f32 %v1209, %v1211
    %v1216 = vmul.f32 %v1209, %v1212
    %v1217 = vmul.f32 %v1209, %v1213
    %v1218 = vmul.f32 %v1209, %v1214
    %v1219 = vadd.f32 %v1203, %v1215
    %v1220 = vadd.f32 %v1204, %v1216
    %v1221 = vadd.f32 %v1205, %v1217
    %v1222 = vadd.f32 %v1206, %v1218
    %1223 = vrot.lane.b32.xlu0 %v1061, 15
    %v1224 = vpop.permute.xlu0 %1223
    %1225 = vrot.lane.b32.xlu0 %v1062, 15
    %v1226 = vpop.permute.xlu0 %1225
    %1227 = vrot.lane.b32.xlu0 %v1063, 15
    %v1228 = vpop.permute.xlu0 %1227
    %1229 = vrot.lane.b32.xlu0 %v1064, 15
    %v1230 = vpop.permute.xlu0 %1229
    %v1231 = vsel %vm304, %v1228, %v1230
    %v1232 = vsel %vm304, %v1226, %v1228
    %v1233 = vsel %vm304, %v1224, %v1226
    %v1234 = vsel %vm304, %v1230, %v1224
    %v1235 = vmul.f32 %v1234, %v310
    %v1236 = vmul.f32 %v1233, %v311
    %v1237 = vmul.f32 %v1232, %v312
    %v1238 = vmul.f32 %v1231, %v313
    %1239 = vset.pattern.permute.xlu0 8
    %1240 = vperm.xlu0 %1239, %v1065
    %v1241 = vpop.permute.xlu0 %1240
    %v1243 = vperm.slane %v1235, 0
    %v1244 = vperm.slane %v1236, 0
    %v1245 = vperm.slane %v1237, 0
    %v1246 = vperm.slane %v1238, 0
    %v1247 = vmul.f32 %v1241, %v1243
    %v1248 = vmul.f32 %v1241, %v1244
    %v1249 = vmul.f32 %v1241, %v1245
    %v1250 = vmul.f32 %v1241, %v1246
    %v1251 = vadd.f32 %v1219, %v1247
    %v1252 = vadd.f32 %v1220, %v1248
    %v1253 = vadd.f32 %v1221, %v1249
    %v1254 = vadd.f32 %v1222, %v1250
    %1255 = vset.pattern.permute.xlu0 9
    %1256 = vperm.xlu0 %1255, %v1065
    %v1257 = vpop.permute.xlu0 %1256
    %v1259 = vperm.slane %v1235, 1
    %v1260 = vperm.slane %v1236, 1
    %v1261 = vperm.slane %v1237, 1
    %v1262 = vperm.slane %v1238, 1
    %v1263 = vmul.f32 %v1257, %v1259
    %v1264 = vmul.f32 %v1257, %v1260
    %v1265 = vmul.f32 %v1257, %v1261
    %v1266 = vmul.f32 %v1257, %v1262
    %v1267 = vadd.f32 %v1251, %v1263
    %v1268 = vadd.f32 %v1252, %v1264
    %v1269 = vadd.f32 %v1253, %v1265
    %v1270 = vadd.f32 %v1254, %v1266
    %1271 = vset.pattern.permute.xlu0 10
    %1272 = vperm.xlu0 %1271, %v1065
    %v1273 = vpop.permute.xlu0 %1272
    %v1275 = vperm.slane %v1235, 2
    %v1276 = vperm.slane %v1236, 2
    %v1277 = vperm.slane %v1237, 2
    %v1278 = vperm.slane %v1238, 2
    %v1279 = vmul.f32 %v1273, %v1275
    %v1280 = vmul.f32 %v1273, %v1276
    %v1281 = vmul.f32 %v1273, %v1277
    %v1282 = vmul.f32 %v1273, %v1278
    %v1283 = vadd.f32 %v1267, %v1279
    %v1284 = vadd.f32 %v1268, %v1280
    %v1285 = vadd.f32 %v1269, %v1281
    %v1286 = vadd.f32 %v1270, %v1282
    %1287 = vset.pattern.permute.xlu0 11
    %1288 = vperm.xlu0 %1287, %v1065
    %v1289 = vpop.permute.xlu0 %1288
    %v1291 = vperm.slane %v1235, 3
    %v1292 = vperm.slane %v1236, 3
    %v1293 = vperm.slane %v1237, 3
    %v1294 = vperm.slane %v1238, 3
    %v1295 = vmul.f32 %v1289, %v1291
    %v1296 = vmul.f32 %v1289, %v1292
    %v1297 = vmul.f32 %v1289, %v1293
    %v1298 = vmul.f32 %v1289, %v1294
    %v1299 = vadd.f32 %v1283, %v1295
    %v1300 = vadd.f32 %v1284, %v1296
    %v1301 = vadd.f32 %v1285, %v1297
    %v1302 = vadd.f32 %v1286, %v1298
    %1303 = vrot.lane.b32.xlu0 %v1061, 1
    %v1304 = vpop.permute.xlu0 %1303
    %1305 = vrot.lane.b32.xlu0 %v1062, 1
    %v1306 = vpop.permute.xlu0 %1305
    %1307 = vrot.lane.b32.xlu0 %v1063, 1
    %v1308 = vpop.permute.xlu0 %1307
    %1309 = vrot.lane.b32.xlu0 %v1064, 1
    %v1310 = vpop.permute.xlu0 %1309
    %v1311 = vsel %vm405, %v1308, %v1310
    %v1312 = vsel %vm405, %v1306, %v1308
    %v1313 = vsel %vm405, %v1304, %v1306
    %v1314 = vsel %vm405, %v1310, %v1304
    %v1315 = vmul.f32 %v1314, %v411
    %v1316 = vmul.f32 %v1313, %v412
    %v1317 = vmul.f32 %v1312, %v413
    %v1318 = vmul.f32 %v1311, %v414
    %1319 = vset.pattern.permute.xlu0 12
    %1320 = vperm.xlu0 %1319, %v1065
    %v1321 = vpop.permute.xlu0 %1320
    %v1323 = vperm.slane %v1315, 0
    %v1324 = vperm.slane %v1316, 0
    %v1325 = vperm.slane %v1317, 0
    %v1326 = vperm.slane %v1318, 0
    %v1327 = vmul.f32 %v1321, %v1323
    %v1328 = vmul.f32 %v1321, %v1324
    %v1329 = vmul.f32 %v1321, %v1325
    %v1330 = vmul.f32 %v1321, %v1326
    %v1331 = vadd.f32 %v1299, %v1327
    %v1332 = vadd.f32 %v1300, %v1328
    %v1333 = vadd.f32 %v1301, %v1329
    %v1334 = vadd.f32 %v1302, %v1330
    %1335 = vset.pattern.permute.xlu0 13
    %1336 = vperm.xlu0 %1335, %v1065
    %v1337 = vpop.permute.xlu0 %1336
    %v1339 = vperm.slane %v1315, 1
    %v1340 = vperm.slane %v1316, 1
    %v1341 = vperm.slane %v1317, 1
    %v1342 = vperm.slane %v1318, 1
    %v1343 = vmul.f32 %v1337, %v1339
    %v1344 = vmul.f32 %v1337, %v1340
    %v1345 = vmul.f32 %v1337, %v1341
    %v1346 = vmul.f32 %v1337, %v1342
    %v1347 = vadd.f32 %v1331, %v1343
    %v1348 = vadd.f32 %v1332, %v1344
    %v1349 = vadd.f32 %v1333, %v1345
    %v1350 = vadd.f32 %v1334, %v1346
    %1351 = vset.pattern.permute.xlu0 14
    %1352 = vperm.xlu0 %1351, %v1065
    %v1353 = vpop.permute.xlu0 %1352
    %v1355 = vperm.slane %v1315, 2
    %v1356 = vperm.slane %v1316, 2
    %v1357 = vperm.slane %v1317, 2
    %v1358 = vperm.slane %v1318, 2
    %v1359 = vmul.f32 %v1353, %v1355
    %v1360 = vmul.f32 %v1353, %v1356
    %v1361 = vmul.f32 %v1353, %v1357
    %v1362 = vmul.f32 %v1353, %v1358
    %v1363 = vadd.f32 %v1347, %v1359
    %v1364 = vadd.f32 %v1348, %v1360
    %v1365 = vadd.f32 %v1349, %v1361
    %v1366 = vadd.f32 %v1350, %v1362
    %1367 = vset.pattern.permute.xlu0 15
    %1368 = vperm.xlu0 %1367, %v1065
    %v1369 = vpop.permute.xlu0 %1368
    %v1371 = vperm.slane %v1315, 3
    %v1372 = vperm.slane %v1316, 3
    %v1373 = vperm.slane %v1317, 3
    %v1374 = vperm.slane %v1318, 3
    %v1375 = vmul.f32 %v1369, %v1371
    %v1376 = vmul.f32 %v1369, %v1372
    %v1377 = vmul.f32 %v1369, %v1373
    %v1378 = vmul.f32 %v1369, %v1374
    %v1379 = vadd.f32 %v1363, %v1375
    %v1380 = vadd.f32 %v1364, %v1376
    %v1381 = vadd.f32 %v1365, %v1377
    %v1382 = vadd.f32 %v1366, %v1378
    %1383 = vset.pattern.permute.xlu0 16
    %1384 = vperm.xlu0 %1383, %v1065
    %v1385 = vpop.permute.xlu0 %1384
    %v1387 = vperm.slane %v1061, 0
    %v1388 = vperm.slane %v1062, 0
    %v1389 = vperm.slane %v1063, 0
    %v1390 = vperm.slane %v1064, 0
    %v1391 = vmul.f32 %v1385, %v1387
    %v1392 = vmul.f32 %v1385, %v1388
    %v1393 = vmul.f32 %v1385, %v1389
    %v1394 = vmul.f32 %v1385, %v1390
    %v1395 = vadd.f32 %v1379, %v1391
    %v1396 = vadd.f32 %v1380, %v1392
    %v1397 = vadd.f32 %v1381, %v1393
    %v1398 = vadd.f32 %v1382, %v1394
    %1399 = vset.pattern.permute.xlu0 17
    %1400 = vperm.xlu0 %1399, %v1065
    %v1401 = vpop.permute.xlu0 %1400
    %v1403 = vperm.slane %v1061, 1
    %v1404 = vperm.slane %v1062, 1
    %v1405 = vperm.slane %v1063, 1
    %v1406 = vperm.slane %v1064, 1
    %v1407 = vmul.f32 %v1401, %v1403
    %v1408 = vmul.f32 %v1401, %v1404
    %v1409 = vmul.f32 %v1401, %v1405
    %v1410 = vmul.f32 %v1401, %v1406
    %v1411 = vadd.f32 %v1395, %v1407
    %v1412 = vadd.f32 %v1396, %v1408
    %v1413 = vadd.f32 %v1397, %v1409
    %v1414 = vadd.f32 %v1398, %v1410
    %1415 = vset.pattern.permute.xlu0 18
    %1416 = vperm.xlu0 %1415, %v1065
    %v1417 = vpop.permute.xlu0 %1416
    %v1419 = vperm.slane %v1061, 2
    %v1420 = vperm.slane %v1062, 2
    %v1421 = vperm.slane %v1063, 2
    %v1422 = vperm.slane %v1064, 2
    %v1423 = vmul.f32 %v1417, %v1419
    %v1424 = vmul.f32 %v1417, %v1420
    %v1425 = vmul.f32 %v1417, %v1421
    %v1426 = vmul.f32 %v1417, %v1422
    %v1427 = vadd.f32 %v1411, %v1423
    %v1428 = vadd.f32 %v1412, %v1424
    %v1429 = vadd.f32 %v1413, %v1425
    %v1430 = vadd.f32 %v1414, %v1426
    %1431 = vset.pattern.permute.xlu0 19
    %1432 = vperm.xlu0 %1431, %v1065
    %v1433 = vpop.permute.xlu0 %1432
    %v1435 = vperm.slane %v1061, 3
    %v1436 = vperm.slane %v1062, 3
    %v1437 = vperm.slane %v1063, 3
    %v1438 = vperm.slane %v1064, 3
    %v1439 = vmul.f32 %v1433, %v1435
    %v1440 = vmul.f32 %v1433, %v1436
    %v1441 = vmul.f32 %v1433, %v1437
    %v1442 = vmul.f32 %v1433, %v1438
    %v1443 = vadd.f32 %v1427, %v1439
    %v1444 = vadd.f32 %v1428, %v1440
    %v1445 = vadd.f32 %v1429, %v1441
    %v1446 = vadd.f32 %v1430, %v1442
    %1447 = vrot.lane.b32.xlu0 %v1061, 127
    %v1448 = vpop.permute.xlu0 %1447
    %1449 = vrot.lane.b32.xlu0 %v1062, 127
    %v1450 = vpop.permute.xlu0 %1449
    %1451 = vrot.lane.b32.xlu0 %v1063, 127
    %v1452 = vpop.permute.xlu0 %1451
    %1453 = vrot.lane.b32.xlu0 %v1064, 127
    %v1454 = vpop.permute.xlu0 %1453
    %v1455 = vsel %vm602, %v1452, %v1454
    %v1456 = vsel %vm602, %v1450, %v1452
    %v1457 = vsel %vm602, %v1448, %v1450
    %v1458 = vsel %vm602, %v1454, %v1448
    %v1459 = vmul.f32 %v1457, %v608
    %v1460 = vmul.f32 %v1456, %v609
    %v1461 = vmul.f32 %v1455, %v610
    %v1462 = vmul.f32 %v1458, %v611
    %1463 = vset.pattern.permute.xlu0 20
    %1464 = vperm.xlu0 %1463, %v1065
    %v1465 = vpop.permute.xlu0 %1464
    %v1467 = vperm.slane %v1459, 0
    %v1468 = vperm.slane %v1460, 0
    %v1469 = vperm.slane %v1461, 0
    %v1470 = vperm.slane %v1462, 0
    %v1471 = vmul.f32 %v1465, %v1467
    %v1472 = vmul.f32 %v1465, %v1468
    %v1473 = vmul.f32 %v1465, %v1469
    %v1474 = vmul.f32 %v1465, %v1470
    %v1475 = vadd.f32 %v1443, %v1471
    %v1476 = vadd.f32 %v1444, %v1472
    %v1477 = vadd.f32 %v1445, %v1473
    %v1478 = vadd.f32 %v1446, %v1474
    %1479 = vset.pattern.permute.xlu0 21
    %1480 = vperm.xlu0 %1479, %v1065
    %v1481 = vpop.permute.xlu0 %1480
    %v1483 = vperm.slane %v1459, 1
    %v1484 = vperm.slane %v1460, 1
    %v1485 = vperm.slane %v1461, 1
    %v1486 = vperm.slane %v1462, 1
    %v1487 = vmul.f32 %v1481, %v1483
    %v1488 = vmul.f32 %v1481, %v1484
    %v1489 = vmul.f32 %v1481, %v1485
    %v1490 = vmul.f32 %v1481, %v1486
    %v1491 = vadd.f32 %v1475, %v1487
    %v1492 = vadd.f32 %v1476, %v1488
    %v1493 = vadd.f32 %v1477, %v1489
    %v1494 = vadd.f32 %v1478, %v1490
    %1495 = vset.pattern.permute.xlu0 22
    %1496 = vperm.xlu0 %1495, %v1065
    %v1497 = vpop.permute.xlu0 %1496
    %v1499 = vperm.slane %v1459, 2
    %v1500 = vperm.slane %v1460, 2
    %v1501 = vperm.slane %v1461, 2
    %v1502 = vperm.slane %v1462, 2
    %v1503 = vmul.f32 %v1497, %v1499
    %v1504 = vmul.f32 %v1497, %v1500
    %v1505 = vmul.f32 %v1497, %v1501
    %v1506 = vmul.f32 %v1497, %v1502
    %v1507 = vadd.f32 %v1491, %v1503
    %v1508 = vadd.f32 %v1492, %v1504
    %v1509 = vadd.f32 %v1493, %v1505
    %v1510 = vadd.f32 %v1494, %v1506
    %1511 = vset.pattern.permute.xlu0 23
    %1512 = vperm.xlu0 %1511, %v1065
    %v1513 = vpop.permute.xlu0 %1512
    %v1515 = vperm.slane %v1459, 3
    %v1516 = vperm.slane %v1460, 3
    %v1517 = vperm.slane %v1461, 3
    %v1518 = vperm.slane %v1462, 3
    %v1519 = vmul.f32 %v1513, %v1515
    %v1520 = vmul.f32 %v1513, %v1516
    %v1521 = vmul.f32 %v1513, %v1517
    %v1522 = vmul.f32 %v1513, %v1518
    %v1523 = vadd.f32 %v1507, %v1519
    %v1524 = vadd.f32 %v1508, %v1520
    %v1525 = vadd.f32 %v1509, %v1521
    %v1526 = vadd.f32 %v1510, %v1522
    %1527 = vrot.lane.b32.xlu0 %v1061, 113
    %v1528 = vpop.permute.xlu0 %1527
    %1529 = vrot.lane.b32.xlu0 %v1062, 113
    %v1530 = vpop.permute.xlu0 %1529
    %1531 = vrot.lane.b32.xlu0 %v1063, 113
    %v1532 = vpop.permute.xlu0 %1531
    %1533 = vrot.lane.b32.xlu0 %v1064, 113
    %v1534 = vpop.permute.xlu0 %1533
    %v1535 = vsel %vm703, %v1532, %v1534
    %v1536 = vsel %vm703, %v1530, %v1532
    %v1537 = vsel %vm703, %v1528, %v1530
    %v1538 = vsel %vm703, %v1534, %v1528
    %v1539 = vmul.f32 %v1537, %v709
    %v1540 = vmul.f32 %v1536, %v710
    %v1541 = vmul.f32 %v1535, %v711
    %v1542 = vmul.f32 %v1538, %v712
    %1543 = vset.pattern.permute.xlu0 24
    %1544 = vperm.xlu0 %1543, %v1065
    %v1545 = vpop.permute.xlu0 %1544
    %v1547 = vperm.slane %v1539, 0
    %v1548 = vperm.slane %v1540, 0
    %v1549 = vperm.slane %v1541, 0
    %v1550 = vperm.slane %v1542, 0
    %v1551 = vmul.f32 %v1545, %v1547
    %v1552 = vmul.f32 %v1545, %v1548
    %v1553 = vmul.f32 %v1545, %v1549
    %v1554 = vmul.f32 %v1545, %v1550
    %v1555 = vadd.f32 %v1523, %v1551
    %v1556 = vadd.f32 %v1524, %v1552
    %v1557 = vadd.f32 %v1525, %v1553
    %v1558 = vadd.f32 %v1526, %v1554
    %1559 = vset.pattern.permute.xlu0 25
    %1560 = vperm.xlu0 %1559, %v1065
    %v1561 = vpop.permute.xlu0 %1560
    %v1563 = vperm.slane %v1539, 1
    %v1564 = vperm.slane %v1540, 1
    %v1565 = vperm.slane %v1541, 1
    %v1566 = vperm.slane %v1542, 1
    %v1567 = vmul.f32 %v1561, %v1563
    %v1568 = vmul.f32 %v1561, %v1564
    %v1569 = vmul.f32 %v1561, %v1565
    %v1570 = vmul.f32 %v1561, %v1566
    %v1571 = vadd.f32 %v1555, %v1567
    %v1572 = vadd.f32 %v1556, %v1568
    %v1573 = vadd.f32 %v1557, %v1569
    %v1574 = vadd.f32 %v1558, %v1570
    %1575 = vset.pattern.permute.xlu0 26
    %1576 = vperm.xlu0 %1575, %v1065
    %v1577 = vpop.permute.xlu0 %1576
    %v1579 = vperm.slane %v1539, 2
    %v1580 = vperm.slane %v1540, 2
    %v1581 = vperm.slane %v1541, 2
    %v1582 = vperm.slane %v1542, 2
    %v1583 = vmul.f32 %v1577, %v1579
    %v1584 = vmul.f32 %v1577, %v1580
    %v1585 = vmul.f32 %v1577, %v1581
    %v1586 = vmul.f32 %v1577, %v1582
    %v1587 = vadd.f32 %v1571, %v1583
    %v1588 = vadd.f32 %v1572, %v1584
    %v1589 = vadd.f32 %v1573, %v1585
    %v1590 = vadd.f32 %v1574, %v1586
    %1591 = vset.pattern.permute.xlu0 27
    %1592 = vperm.xlu0 %1591, %v1065
    %v1593 = vpop.permute.xlu0 %1592
    %v1595 = vperm.slane %v1539, 3
    %v1596 = vperm.slane %v1540, 3
    %v1597 = vperm.slane %v1541, 3
    %v1598 = vperm.slane %v1542, 3
    %v1599 = vmul.f32 %v1593, %v1595
    %v1600 = vmul.f32 %v1593, %v1596
    %v1601 = vmul.f32 %v1593, %v1597
    %v1602 = vmul.f32 %v1593, %v1598
    %v1603 = vadd.f32 %v1587, %v1599
    %v1604 = vadd.f32 %v1588, %v1600
    %v1605 = vadd.f32 %v1589, %v1601
    %v1606 = vadd.f32 %v1590, %v1602
    %1607 = vrot.lane.b32.xlu0 %v1061, 112
    %v1608 = vpop.permute.xlu0 %1607
    %1609 = vrot.lane.b32.xlu0 %v1062, 112
    %v1610 = vpop.permute.xlu0 %1609
    %1611 = vrot.lane.b32.xlu0 %v1063, 112
    %v1612 = vpop.permute.xlu0 %1611
    %1613 = vrot.lane.b32.xlu0 %v1064, 112
    %v1614 = vpop.permute.xlu0 %1613
    %v1615 = vsel %vm804, %v1612, %v1614
    %v1616 = vsel %vm804, %v1610, %v1612
    %v1617 = vsel %vm804, %v1608, %v1610
    %v1618 = vsel %vm804, %v1614, %v1608
    %v1619 = vmul.f32 %v1617, %v810
    %v1620 = vmul.f32 %v1616, %v811
    %v1621 = vmul.f32 %v1615, %v812
    %v1622 = vmul.f32 %v1618, %v813
    %1623 = vset.pattern.permute.xlu0 28
    %1624 = vperm.xlu0 %1623, %v1065
    %v1625 = vpop.permute.xlu0 %1624
    %v1627 = vperm.slane %v1619, 0
    %v1628 = vperm.slane %v1620, 0
    %v1629 = vperm.slane %v1621, 0
    %v1630 = vperm.slane %v1622, 0
    %v1631 = vmul.f32 %v1625, %v1627
    %v1632 = vmul.f32 %v1625, %v1628
    %v1633 = vmul.f32 %v1625, %v1629
    %v1634 = vmul.f32 %v1625, %v1630
    %v1635 = vadd.f32 %v1603, %v1631
    %v1636 = vadd.f32 %v1604, %v1632
    %v1637 = vadd.f32 %v1605, %v1633
    %v1638 = vadd.f32 %v1606, %v1634
    %1639 = vset.pattern.permute.xlu0 29
    %1640 = vperm.xlu0 %1639, %v1065
    %v1641 = vpop.permute.xlu0 %1640
    %v1643 = vperm.slane %v1619, 1
    %v1644 = vperm.slane %v1620, 1
    %v1645 = vperm.slane %v1621, 1
    %v1646 = vperm.slane %v1622, 1
    %v1647 = vmul.f32 %v1641, %v1643
    %v1648 = vmul.f32 %v1641, %v1644
    %v1649 = vmul.f32 %v1641, %v1645
    %v1650 = vmul.f32 %v1641, %v1646
    %v1651 = vadd.f32 %v1635, %v1647
    %v1652 = vadd.f32 %v1636, %v1648
    %v1653 = vadd.f32 %v1637, %v1649
    %v1654 = vadd.f32 %v1638, %v1650
    %1655 = vset.pattern.permute.xlu0 30
    %1656 = vperm.xlu0 %1655, %v1065
    %v1657 = vpop.permute.xlu0 %1656
    %v1659 = vperm.slane %v1619, 2
    %v1660 = vperm.slane %v1620, 2
    %v1661 = vperm.slane %v1621, 2
    %v1662 = vperm.slane %v1622, 2
    %v1663 = vmul.f32 %v1657, %v1659
    %v1664 = vmul.f32 %v1657, %v1660
    %v1665 = vmul.f32 %v1657, %v1661
    %v1666 = vmul.f32 %v1657, %v1662
    %v1667 = vadd.f32 %v1651, %v1663
    %v1668 = vadd.f32 %v1652, %v1664
    %v1669 = vadd.f32 %v1653, %v1665
    %v1670 = vadd.f32 %v1654, %v1666
    %1671 = vset.pattern.permute.xlu0 31
    %1672 = vperm.xlu0 %1671, %v1065
    %v1673 = vpop.permute.xlu0 %1672
    %v1675 = vperm.slane %v1619, 3
    %v1676 = vperm.slane %v1620, 3
    %v1677 = vperm.slane %v1621, 3
    %v1678 = vperm.slane %v1622, 3
    %v1679 = vmul.f32 %v1673, %v1675
    %v1680 = vmul.f32 %v1673, %v1676
    %v1681 = vmul.f32 %v1673, %v1677
    %v1682 = vmul.f32 %v1673, %v1678
    %v1683 = vadd.f32 %v1667, %v1679
    %v1684 = vadd.f32 %v1668, %v1680
    %v1685 = vadd.f32 %v1669, %v1681
    %v1686 = vadd.f32 %v1670, %v1682
    %1687 = vrot.lane.b32.xlu0 %v1061, 111
    %v1688 = vpop.permute.xlu0 %1687
    %1689 = vrot.lane.b32.xlu0 %v1062, 111
    %v1690 = vpop.permute.xlu0 %1689
    %1691 = vrot.lane.b32.xlu0 %v1063, 111
    %v1692 = vpop.permute.xlu0 %1691
    %1693 = vrot.lane.b32.xlu0 %v1064, 111
    %v1694 = vpop.permute.xlu0 %1693
    %v1695 = vsel %vm905, %v1692, %v1694
    %v1696 = vsel %vm905, %v1690, %v1692
    %v1697 = vsel %vm905, %v1688, %v1690
    %v1698 = vsel %vm905, %v1694, %v1688
    %v1699 = vmul.f32 %v1697, %v911
    %v1700 = vmul.f32 %v1696, %v912
    %v1701 = vmul.f32 %v1695, %v913
    %v1702 = vmul.f32 %v1698, %v914
    %1703 = vset.pattern.permute.xlu0 32
    %1704 = vperm.xlu0 %1703, %v1065
    %v1705 = vpop.permute.xlu0 %1704
    %v1707 = vperm.slane %v1699, 0
    %v1708 = vperm.slane %v1700, 0
    %v1709 = vperm.slane %v1701, 0
    %v1710 = vperm.slane %v1702, 0
    %v1711 = vmul.f32 %v1705, %v1707
    %v1712 = vmul.f32 %v1705, %v1708
    %v1713 = vmul.f32 %v1705, %v1709
    %v1714 = vmul.f32 %v1705, %v1710
    %v1715 = vadd.f32 %v1683, %v1711
    %v1716 = vadd.f32 %v1684, %v1712
    %v1717 = vadd.f32 %v1685, %v1713
    %v1718 = vadd.f32 %v1686, %v1714
    %1719 = vset.pattern.permute.xlu0 33
    %1720 = vperm.xlu0 %1719, %v1065
    %v1721 = vpop.permute.xlu0 %1720
    %v1723 = vperm.slane %v1699, 1
    %v1724 = vperm.slane %v1700, 1
    %v1725 = vperm.slane %v1701, 1
    %v1726 = vperm.slane %v1702, 1
    %v1727 = vmul.f32 %v1721, %v1723
    %v1728 = vmul.f32 %v1721, %v1724
    %v1729 = vmul.f32 %v1721, %v1725
    %v1730 = vmul.f32 %v1721, %v1726
    %v1731 = vadd.f32 %v1715, %v1727
    %v1732 = vadd.f32 %v1716, %v1728
    %v1733 = vadd.f32 %v1717, %v1729
    %v1734 = vadd.f32 %v1718, %v1730
    %1735 = vset.pattern.permute.xlu0 34
    %1736 = vperm.xlu0 %1735, %v1065
    %v1737 = vpop.permute.xlu0 %1736
    %v1739 = vperm.slane %v1699, 2
    %v1740 = vperm.slane %v1700, 2
    %v1741 = vperm.slane %v1701, 2
    %v1742 = vperm.slane %v1702, 2
    %v1743 = vmul.f32 %v1737, %v1739
    %v1744 = vmul.f32 %v1737, %v1740
    %v1745 = vmul.f32 %v1737, %v1741
    %v1746 = vmul.f32 %v1737, %v1742
    %v1747 = vadd.f32 %v1731, %v1743
    %v1748 = vadd.f32 %v1732, %v1744
    %v1749 = vadd.f32 %v1733, %v1745
    %v1750 = vadd.f32 %v1734, %v1746
    %1751 = vset.pattern.permute.xlu0 35
    %1752 = vperm.xlu0 %1751, %v1065
    %v1753 = vpop.permute.xlu0 %1752
    %v1755 = vperm.slane %v1699, 3
    %v1756 = vperm.slane %v1700, 3
    %v1757 = vperm.slane %v1701, 3
    %v1758 = vperm.slane %v1702, 3
    %v1759 = vmul.f32 %v1753, %v1755
    %v1760 = vmul.f32 %v1753, %v1756
    %v1761 = vmul.f32 %v1753, %v1757
    %v1762 = vmul.f32 %v1753, %v1758
    %v1763 = vadd.f32 %v1747, %v1759
    %v1764 = vadd.f32 %v1748, %v1760
    %v1765 = vadd.f32 %v1749, %v1761
    %v1766 = vadd.f32 %v1750, %v1762
    %v1767 = vld [vmem:[%s8] sm:$0xf]
    %1769 = vset.pattern.permute.xlu0 0
    %1770 = vperm.xlu0 %1769, %v1767
    %v1771 = vpop.permute.xlu0 %1770
    %v1773 = vadd.f32 %v1763, %v1771
    %v1774 = vadd.f32 %v1764, %v1771
    %v1775 = vadd.f32 %v1765, %v1771
    %v1776 = vadd.f32 %v1766, %v1771
    %v1777 = vsel %vm997, %v1773, 0.0
    %v1778 = vsel %vm997, %v1774, 0.0
    %v1779 = vadd.f32 %v1777, %v1778
    %v1780 = vsel %vm997, %v1775, 0.0
    %v1781 = vadd.f32 %v1779, %v1780
    %v1782 = vsel %vm997, %v1776, 0.0
    %v1783 = vadd.f32 %v1781, %v1782
    %1784 = vadd.xlane.f32.xlu0 %v1783
    %v1785 = vpop.xlane.xlu0 %1784
    %v1786 = vmul.f32 %v1785, 0.001953125
    %v1787 = vsub.f32 %v1773, %v1786
    %v1788 = vsub.f32 %v1774, %v1786
    %v1789 = vsub.f32 %v1775, %v1786
    %v1790 = vsub.f32 %v1776, %v1786
    %v1791 = vmul.f32 %v1787, %v1787
    %v1792 = vmul.f32 %v1788, %v1788
    %v1793 = vmul.f32 %v1789, %v1789
    %v1794 = vmul.f32 %v1790, %v1790
    %v1795 = vsel %vm997, %v1791, 0.0
    %v1796 = vsel %vm997, %v1792, 0.0
    %v1797 = vadd.f32 %v1795, %v1796
    %v1798 = vsel %vm997, %v1793, 0.0
    %v1799 = vadd.f32 %v1797, %v1798
    %v1800 = vsel %vm997, %v1794, 0.0
    %v1801 = vadd.f32 %v1799, %v1800
    %1802 = vadd.xlane.f32.xlu0 %v1801
    %v1803 = vpop.xlane.xlu0 %1802
    %v1804 = vmul.f32 %v1803, 0.001953125
    %v1805 = vadd.f32 %v1804, 1e-05
    %v1806 = vrsqrt.pop %v1805
    %v1807 = vmul.f32 %v1806, %v1805
    %v1808 = vmul.f32 %v1807, %v1806
    %v1809 = vmul.f32 0.5, %v1808
    %v1810 = vsub.f32 1.5, %v1809
    %v1811 = vmul.f32 %v1806, %v1810
    %vm1812 = vweird.f32 %v1805
    %vm1813 = vweird.f32 %v1806
    %vm1814 = vmor %vm1812, %vm1813
    %v1815 = vsel %vm1814, %v1806, %v1811
    %v1816 = vmul.f32 %v1787, %v1815
    %v1817 = vmul.f32 %v1788, %v1815
    %v1818 = vmul.f32 %v1789, %v1815
    %v1819 = vmul.f32 %v1790, %v1815
    %v1820 = vld [vmem:[%s9] sm:$0xf]
    %1822 = vset.pattern.permute.xlu0 0
    %1823 = vperm.xlu0 %1822, %v1820
    %v1824 = vpop.permute.xlu0 %1823
    %v1826 = vmul.f32 %v1816, %v1824
    %v1827 = vmul.f32 %v1817, %v1824
    %v1828 = vmul.f32 %v1818, %v1824
    %v1829 = vmul.f32 %v1819, %v1824
    %v1830 = vld [vmem:[%s10] sm:$0xf]
    %1832 = vset.pattern.permute.xlu0 0
    %1833 = vperm.xlu0 %1832, %v1830
    %v1834 = vpop.permute.xlu0 %1833
    %v1836 = vadd.f32 %v1826, %v1834
    %v1837 = vadd.f32 %v1827, %v1834
    %v1838 = vadd.f32 %v1828, %v1834
    %v1839 = vadd.f32 %v1829, %v1834
    %1840 = vst [vmem:[#allocation1] ss:$2 sm:$0xff] %v79
    %s1841 = scalar_lea.vmem [#allocation1], 16
    %1842 = vst [vmem:[%s1841] ss:$2 sm:$0xff] %v80
    %v1843 = vld.sshfl [vmem:[#allocation1] sm:$0xff pattern:$0x75316420]
    %v1844 = vld.sshfl [vmem:[#allocation1 + $0x8] sm:$0xff pattern:$0x75316420]
    %v1845 = vld.sshfl [vmem:[#allocation1 + $0x10] sm:$0xff pattern:$0x75316420]
    %v1846 = vld.sshfl [vmem:[#allocation1 + $0x18] sm:$0xff pattern:$0x75316420]
    %v1851 = vadd.f32 %v1836, %v1843
    %v1852 = vadd.f32 %v1837, %v1844
    %v1853 = vadd.f32 %v1838, %v1845
    %v1854 = vadd.f32 %v1839, %v1846
    %v1855 = vmax.f32 %v1851, 0.0
    %v1856 = vmax.f32 %v1852, 0.0
    %v1857 = vmax.f32 %v1853, 0.0
    %v1858 = vmax.f32 %v1854, 0.0
    %v1863 = vrot.slane %v1856, 4
    %v1864 = vrot.slane %v1858, 4
    %v1865 = vsel %vm997, %v1855, %v1863
    %v1866 = vsel %vm997, %v1857, %v1864
    %1869 = vst [vmem:[#allocation5] sm:$0xff] %v1865
    %1870 = vst [vmem:[#allocation5 + $0x8] sm:$0xff] %v1866
    // Predicated region
    $region50: #{tpu_custom_call.1} parent=1 // pred_check
      _
    $region51: #{tpu_custom_call.1} parent=1 // pred_check_branch
      %1872 = sbr.rel (0) target = $region53
    $region52: #{tpu_custom_call.1} parent=1 // pred_region
      %1874 = vsyncadd [#allocation4], 0
      %s1876 = sshll.u32 [#allocation5], 4
      %s1877 = int_to_ptr.vmem [resolvable:$true] %s1876
      %s1878 = sshll.u32 %s11, 4
      %s1879 = int_to_ptr.hbm [resolvable:$true] %s1878
      %1881 = dma.vmem_to_hbm [thread:$0]  %s1877, 256, %s1879, [#allocation4]
    $region53: #{tpu_custom_call.1} parent=1 // pred_fallthru
      _
    // Predicated region
    $region54: #{tpu_custom_call.1} parent=1 // pred_check
      _
    $region55: #{tpu_custom_call.1} parent=1 // pred_check_branch
      %1883 = sbr.rel (0) target = $region57
    $region56: #{tpu_custom_call.1} parent=1 // pred_region
      %1885 = dma.done [#allocation4], 256
    $region57: #{tpu_custom_call.1} parent=1 // pred_fallthru
      _
    %1886 = vsyncpa [#allocation3], 1
    %1887 = vsyncpa [#allocation4], 1

</llo_original>
